<compile_context>
chip_gen: v7x
topology: tpu7x:2x2x1
jax: 0.10.0
libtpu: 0.0.40
codegen_flags: <defaults>
</compile_context>

<pallas_src>
import functools

import jax
import jax.numpy as jnp
from jax.experimental import pallas as pl
from jax.experimental.pallas import tpu as pltpu


_LN_EPS = 1e-5  # PyTorch nn.LayerNorm default eps
# Safe on every generation (v7x has only 64 MiB physical VMEM per core); the
# demo shapes need only a few hundred KiB.  Re-derive when scaling tiles.
_VMEM_LIMIT = 48 * 1024 * 1024


# ----------------------------------------------------------------------------
# In-kernel helpers (f32 math)
# ----------------------------------------------------------------------------
def _layernorm(x, g, b, eps):
    mean = jnp.mean(x, axis=-1, keepdims=True)
    var = jnp.mean(jnp.square(x - mean), axis=-1, keepdims=True)
    return (x - mean) * jax.lax.rsqrt(var + eps) * g + b


def _gelu(x):
    # TODO(synk): PyTorch nn.GELU() default is the exact erf formulation; the
    # tanh approximation is used here for guaranteed Mosaic lowering (~1e-3).
    c = 0.7978845608028654  # sqrt(2/pi)
    return 0.5 * x * (1.0 + jnp.tanh(c * (x + 0.044715 * x * x * x)))


# ----------------------------------------------------------------------------
# Fused whole-transformer kernel
#   grid = (batch_tiles, depth); depth axis is "arbitrary" (sequential),
#   residual stream is held in a VMEM scratch across the depth axis.
# ----------------------------------------------------------------------------
def _fused_transformer_kernel(
        x_ref, pos_ref,
        ln1g_ref, ln1b_ref, wqkv_ref, wout_ref, bout_ref,
        ln2g_ref, ln2b_ref, w1_ref, b1_ref, w2_ref, b2_ref,
        ng_ref, nb_ref,
        o_ref,
        xres_ref,
        *, heads, dim_head, eps):
    layer = pl.program_id(1)
    n_layers = pl.num_programs(1)

    Bb, n, dim = x_ref.shape
    inner = heads * dim_head
    T = Bb * n  # flattened token count for this batch tile

    # -- layer 0: bring the input into the VMEM-resident residual stream and
    #    add the positional embedding (done once, like the PyTorch module). --
    @pl.when(layer == 0)
    def _():
        x0 = x_ref[...].astype(jnp.float32).reshape(T, dim)
        pos = pos_ref[...].astype(jnp.float32)                 # (n, dim)
        xres_ref[...] = x0 + jnp.concatenate([pos] * Bb, axis=0)

    x = xres_ref[...]                                          # (T, dim) f32

    # ------------------------- Attention block ------------------------------
    h = _layernorm(x, ln1g_ref[...], ln1b_ref[...], eps)
    qkv = jnp.dot(h.astype(jnp.bfloat16), wqkv_ref[...],
                  preferred_element_type=jnp.float32)          # (T, 3*inner)

    # (batch*heads)-batched q/k/v built from static row/lane slices.
    def gather(which):
        base = which * inner
        return jnp.stack(
            [qkv[b * n:(b + 1) * n,
                 base + hd * dim_head: base + (hd + 1) * dim_head]
             for b in range(Bb) for hd in range(heads)], axis=0)

    q = gather(0).astype(jnp.bfloat16)                         # (Bb*H, n, dh)
    k = gather(1).astype(jnp.bfloat16)
    v = gather(2).astype(jnp.bfloat16)

    # scale (dim_head**-0.5) is folded into the Q columns of w_qkv at init.
    s = jnp.einsum('bqd,bkd->bqk', q, k,
                   preferred_element_type=jnp.float32)         # (Bb*H, n, n)
    s = s - jnp.max(s, axis=-1, keepdims=True)                 # stable softmax
    p = jnp.exp(s)
    inv = pl.reciprocal(jnp.sum(p, axis=-1, keepdims=True), approx=True)
    o = jnp.einsum('bqk,bkd->bqd', p.astype(jnp.bfloat16), v,
                   preferred_element_type=jnp.float32)         # (Bb*H, n, dh)
    o = o * inv                                                # norm after PV

    # merge heads back:  b h n d -> (b n) (h d)
    attn = jnp.concatenate(
        [jnp.concatenate([o[b * heads + hd] for hd in range(heads)], axis=-1)
         for b in range(Bb)], axis=0)                          # (T, inner)

    proj = jnp.dot(attn.astype(jnp.bfloat16), wout_ref[...],
                   preferred_element_type=jnp.float32) + bout_ref[...]
    x = x + proj                                               # residual add

    # ------------------------- FeedForward block ----------------------------
    h = _layernorm(x, ln2g_ref[...], ln2b_ref[...], eps)
    h1 = jnp.dot(h.astype(jnp.bfloat16), w1_ref[...],
                 preferred_element_type=jnp.float32) + b1_ref[...]
    h1 = _gelu(h1)
    h2 = jnp.dot(h1.astype(jnp.bfloat16), w2_ref[...],
                 preferred_element_type=jnp.float32) + b2_ref[...]
    x = x + h2                                                 # residual add

    xres_ref[...] = x                                          # keep in VMEM

    # -- last layer: fused final LayerNorm, single HBM store of the output --
    @pl.when(layer == n_layers - 1)
    def _():
        y = _layernorm(x, ng_ref[...], nb_ref[...], eps).astype(o_ref.dtype)
        for b in range(Bb):
            o_ref[b] = y[b * n:(b + 1) * n, :]


# ----------------------------------------------------------------------------
# Wrapper
# ----------------------------------------------------------------------------
def transformer_forward(x, params, *, heads, dim_head):
    B, n, dim = x.shape
    depth = params["w_qkv"].shape[0]
    inner = heads * dim_head
    mlp = params["w1"].shape[2]
    pos = params["pos"][:, :n, :]                              # (1, n, dim)

    # Batch tile: largest divisor of B with <= ~512 tokens per grid step.
    bb = 1
    for cand in range(B, 0, -1):
        if B % cand == 0 and cand * n <= 512:
            bb = cand
            break
    num_bt = B // bb

    kern = functools.partial(_fused_transformer_kernel, heads=heads,
                             dim_head=dim_head, eps=_LN_EPS)

    # Cost estimate for the whole fused forward.
    T = B * n
    flops_layer = (2 * T * dim * 3 * inner                 # QKV projection
                   + 2 * B * heads * n * n * dim_head * 2  # QK^T and PV
                   + 2 * T * inner * dim                    # output projection
                   + 2 * T * dim * mlp * 2)                 # FF matmuls
    cost = pl.CostEstimate(
        flops=int(depth * flops_layer),
        transcendentals=int(depth * (B * heads * n * n + T * mlp)),
        bytes_accessed=int(
            4 * 2 * T * dim                                         # x in/out
            + 2 * depth * (dim * 3 * inner + inner * dim + 2 * dim * mlp)
            + 4 * depth * (4 * dim + mlp) + 4 * n * dim))

    in_specs = [
        pl.BlockSpec((bb, n, dim), lambda t, l: (t, 0, 0)),            # x
        pl.BlockSpec((None, n, dim), lambda t, l: (0, 0, 0)),          # pos
        pl.BlockSpec((None, 1, dim), lambda t, l: (l, 0, 0)),          # ln1_g
        pl.BlockSpec((None, 1, dim), lambda t, l: (l, 0, 0)),          # ln1_b
        pl.BlockSpec((None, dim, 3 * inner), lambda t, l: (l, 0, 0)),  # w_qkv
        pl.BlockSpec((None, inner, dim), lambda t, l: (l, 0, 0)),      # w_out
        pl.BlockSpec((None, 1, dim), lambda t, l: (l, 0, 0)),          # b_out
        pl.BlockSpec((None, 1, dim), lambda t, l: (l, 0, 0)),          # ln2_g
        pl.BlockSpec((None, 1, dim), lambda t, l: (l, 0, 0)),          # ln2_b
        pl.BlockSpec((None, dim, mlp), lambda t, l: (l, 0, 0)),        # w1
        pl.BlockSpec((None, 1, mlp), lambda t, l: (l, 0, 0)),          # b1
        pl.BlockSpec((None, mlp, dim), lambda t, l: (l, 0, 0)),        # w2
        pl.BlockSpec((None, 1, dim), lambda t, l: (l, 0, 0)),          # b2
        pl.BlockSpec((1, dim), lambda t, l: (0, 0)),                   # norm_g
        pl.BlockSpec((1, dim), lambda t, l: (0, 0)),                   # norm_b
    ]

    return pl.pallas_call(
        kern,
        out_shape=jax.ShapeDtypeStruct((B, n, dim), jnp.float32),
        grid=(num_bt, depth),
        in_specs=in_specs,
        out_specs=pl.BlockSpec((bb, n, dim), lambda t, l: (t, 0, 0)),
        scratch_shapes=[pltpu.VMEM((bb * n, dim), jnp.float32)],
        compiler_params=pltpu.CompilerParams(
            dimension_semantics=("parallel", "arbitrary"),
            vmem_limit_bytes=_VMEM_LIMIT),
        cost_estimate=cost,
    )(x, pos,
      params["ln1_g"], params["ln1_b"], params["w_qkv"], params["w_out"],
      params["b_out"], params["ln2_g"], params["ln2_b"], params["w1"],
      params["b1"], params["w2"], params["b2"],
      params["norm_g"], params["norm_b"])


# ----------------------------------------------------------------------------
# Parameter construction (stacked per-layer weights; shapes follow __init__)
# ----------------------------------------------------------------------------
def init_transformer_params(key, *, dim, depth, heads, dim_head, mlp_dim,
                            max_seq_len):
    inner = heads * dim_head
    scale = dim_head ** (-0.5)
    keys = iter(jax.random.split(key, 7 * depth + 1))

    def rand(shape):
        return 0.1 * jax.random.normal(next(keys), shape, jnp.float32)

    def stacked(shape):
        return jnp.stack([rand(shape) for _ in range(depth)], axis=0)

    w_qkv = stacked((dim, 3 * inner))
    # Fold the attention score scale into the Q columns (free at runtime).
    w_qkv = w_qkv.at[:, :, :inner].multiply(scale)

    return dict(
        ln1_g=jnp.ones((depth, 1, dim), jnp.float32),
        ln1_b=jnp.zeros((depth, 1, dim), jnp.float32),
        w_qkv=w_qkv.astype(jnp.bfloat16),
        w_out=stacked((inner, dim)).astype(jnp.bfloat16),
        b_out=0.5 * stacked((1, dim)),
        ln2_g=jnp.ones((depth, 1, dim), jnp.float32),
        ln2_b=jnp.zeros((depth, 1, dim), jnp.float32),
        w1=stacked((dim, mlp_dim)).astype(jnp.bfloat16),
        b1=0.5 * stacked((1, mlp_dim)),
        w2=stacked((mlp_dim, dim)).astype(jnp.bfloat16),
        b2=0.5 * stacked((1, dim)),
        pos=jax.random.normal(next(keys), (1, max_seq_len, dim), jnp.float32),
        norm_g=jnp.ones((1, dim), jnp.float32),
        norm_b=jnp.zeros((1, dim), jnp.float32),
    )


# ----------------------------------------------------------------------------
if __name__ == "__main__":
    DIM = 32
    DEPTH = 2
    HEADS = 4
    DIM_HEAD = 16
    MLP_DIM = 64
    MAX_SEQ_LEN = 256
    BATCH, SEQ = 2, 8

    key = jax.random.PRNGKey(0)
    pkey, xkey = jax.random.split(key)
    params = init_transformer_params(
        pkey, dim=DIM, depth=DEPTH, heads=HEADS, dim_head=DIM_HEAD,
        mlp_dim=MLP_DIM, max_seq_len=MAX_SEQ_LEN)

    x = jax.random.normal(xkey, (BATCH, SEQ, DIM), jnp.float32)  # (b, n, dim)

    out = transformer_forward(x, params, heads=HEADS, dim_head=DIM_HEAD)
    out = jax.block_until_ready(out)

    assert out.shape == (BATCH, SEQ, DIM), out.shape
    assert bool(jnp.all(jnp.isfinite(out)))
    print("KERNEL_OK")
</pallas_src>

<mosaic_0001>
module attributes {stable_mosaic.version = 11 : i64} {
  func.func @_fused_transformer_kernel(%arg0: i32, %arg1: i32, %arg2: memref<2x8x32xf32, #tpu.memory_space<vmem>>, %arg3: memref<1x8x32xf32, #tpu.memory_space<vmem>>, %arg4: memref<1x1x32xf32, #tpu.memory_space<vmem>>, %arg5: memref<1x1x32xf32, #tpu.memory_space<vmem>>, %arg6: memref<1x32x192xbf16, #tpu.memory_space<vmem>>, %arg7: memref<1x64x32xbf16, #tpu.memory_space<vmem>>, %arg8: memref<1x1x32xf32, #tpu.memory_space<vmem>>, %arg9: memref<1x1x32xf32, #tpu.memory_space<vmem>>, %arg10: memref<1x1x32xf32, #tpu.memory_space<vmem>>, %arg11: memref<1x32x64xbf16, #tpu.memory_space<vmem>>, %arg12: memref<1x1x64xf32, #tpu.memory_space<vmem>>, %arg13: memref<1x64x32xbf16, #tpu.memory_space<vmem>>, %arg14: memref<1x1x32xf32, #tpu.memory_space<vmem>>, %arg15: memref<1x32xf32, #tpu.memory_space<vmem>>, %arg16: memref<1x32xf32, #tpu.memory_space<vmem>>, %arg17: memref<2x8x32xf32, #tpu.memory_space<vmem>>, %arg18: memref<16x32xf32, #tpu.memory_space<vmem>>) attributes {dimension_semantics = [#tpu.dimension_semantics<parallel>, #tpu.dimension_semantics<arbitrary>], iteration_bounds = array<i64: 1, 2>, scalar_prefetch = 0 : i64, scratch_operands = 1 : i64, tpu.core_type = #tpu.core_type<tc>, window_params = [{transform_indices = @transform_0, window_bounds = array<i64: 2, 8, 32>}, {pipeline_mode = #tpu.pipeline_mode<synchronous>, transform_indices = @transform_1, window_bounds = array<i64: 1, 8, 32>}, {transform_indices = @transform_2, window_bounds = array<i64: 1, 1, 32>}, {transform_indices = @transform_3, window_bounds = array<i64: 1, 1, 32>}, {transform_indices = @transform_4, window_bounds = array<i64: 1, 32, 192>}, {transform_indices = @transform_5, window_bounds = array<i64: 1, 64, 32>}, {transform_indices = @transform_6, window_bounds = array<i64: 1, 1, 32>}, {transform_indices = @transform_7, window_bounds = array<i64: 1, 1, 32>}, {transform_indices = @transform_8, window_bounds = array<i64: 1, 1, 32>}, {transform_indices = @transform_9, window_bounds = array<i64: 1, 32, 64>}, {transform_indices = @transform_10, window_bounds = array<i64: 1, 1, 64>}, {transform_indices = @transform_11, window_bounds = array<i64: 1, 64, 32>}, {transform_indices = @transform_12, window_bounds = array<i64: 1, 1, 32>}, {pipeline_mode = #tpu.pipeline_mode<synchronous>, transform_indices = @transform_13, window_bounds = array<i64: 1, 32>}, {pipeline_mode = #tpu.pipeline_mode<synchronous>, transform_indices = @transform_14, window_bounds = array<i64: 1, 32>}, {transform_indices = @transform_15, window_bounds = array<i64: 2, 8, 32>}]} {
    %c0_i32 = arith.constant 0 : i32
    %0 = arith.cmpi eq, %arg1, %c0_i32 : i32
    %1 = arith.extui %0 : i1 to i32
    %c0_i32_0 = arith.constant 0 : i32
    %2 = arith.cmpi ne, %1, %c0_i32_0 : i32
    scf.if %2 {
      %c0_59 = arith.constant 0 : index
      %c0_60 = arith.constant 0 : index
      %c0_61 = arith.constant 0 : index
      %189 = vector.load %arg2[%c0_59, %c0_60, %c0_61] : memref<2x8x32xf32, #tpu.memory_space<vmem>>, vector<2x8x32xf32>
      %190 = vector.shape_cast %189 : vector<2x8x32xf32> to vector<16x32xf32>
      %c0_62 = arith.constant 0 : index
      %c0_63 = arith.constant 0 : index
      %c0_64 = arith.constant 0 : index
      %191 = vector.load %arg3[%c0_62, %c0_63, %c0_64] : memref<1x8x32xf32, #tpu.memory_space<vmem>>, vector<1x8x32xf32>
      %192 = vector.shape_cast %191 : vector<1x8x32xf32> to vector<8x32xf32>
      %193 = tpu.concatenate %192, %192 in 0 : vector<8x32xf32>, vector<8x32xf32> -> vector<16x32xf32>
      %194 = arith.addf %190, %193 : vector<16x32xf32>
      %c0_65 = arith.constant 0 : index
      %c0_66 = arith.constant 0 : index
      %195 = vector.load %arg18[%c0_65, %c0_66] : memref<16x32xf32, #tpu.memory_space<vmem>>, vector<16x32xf32>
      tpu.vector_store %arg18[%c0_65, %c0_66], %194 {strides = array<i32>} : memref<16x32xf32, #tpu.memory_space<vmem>>, vector<16x32xf32>,
    } else {
    }
    %c0 = arith.constant 0 : index
    %c0_1 = arith.constant 0 : index
    %3 = vector.load %arg18[%c0, %c0_1] : memref<16x32xf32, #tpu.memory_space<vmem>>, vector<16x32xf32>
    %c0_2 = arith.constant 0 : index
    %c0_3 = arith.constant 0 : index
    %c0_4 = arith.constant 0 : index
    %4 = vector.load %arg4[%c0_2, %c0_3, %c0_4] : memref<1x1x32xf32, #tpu.memory_space<vmem>>, vector<1x1x32xf32>
    %5 = vector.shape_cast %4 : vector<1x1x32xf32> to vector<1x32xf32>
    %c0_5 = arith.constant 0 : index
    %c0_6 = arith.constant 0 : index
    %c0_7 = arith.constant 0 : index
    %6 = vector.load %arg5[%c0_5, %c0_6, %c0_7] : memref<1x1x32xf32, #tpu.memory_space<vmem>>, vector<1x1x32xf32>
    %7 = vector.shape_cast %6 : vector<1x1x32xf32> to vector<1x32xf32>
    %cst = arith.constant dense<0.000000e+00> : vector<16xf32>
    %8 = vector.multi_reduction <add>, %3, %cst [1] : vector<16x32xf32> to vector<16xf32>
    %9 = vector.shape_cast %8 : vector<16xf32> to vector<16x1xf32>
    %cst_8 = arith.constant 3.200000e+01 : f32
    %10 = vector.broadcast %cst_8 : f32 to vector<16x1xf32>
    %11 = arith.divf %9, %10 : vector<16x1xf32>
    %12 = vector.broadcast %11 : vector<16x1xf32> to vector<16x32xf32>
    %13 = arith.subf %3, %12 : vector<16x32xf32>
    %14 = arith.mulf %13, %13 : vector<16x32xf32>
    %cst_9 = arith.constant dense<0.000000e+00> : vector<16xf32>
    %15 = vector.multi_reduction <add>, %14, %cst_9 [1] : vector<16x32xf32> to vector<16xf32>
    %16 = vector.shape_cast %15 : vector<16xf32> to vector<16x1xf32>
    %cst_10 = arith.constant 3.200000e+01 : f32
    %17 = vector.broadcast %cst_10 : f32 to vector<16x1xf32>
    %18 = arith.divf %16, %17 : vector<16x1xf32>
    %19 = vector.broadcast %11 : vector<16x1xf32> to vector<16x32xf32>
    %20 = arith.subf %3, %19 : vector<16x32xf32>
    %cst_11 = arith.constant 9.99999974E-6 : f32
    %21 = vector.broadcast %cst_11 : f32 to vector<16x1xf32>
    %22 = arith.addf %18, %21 : vector<16x1xf32>
    %23 = math.rsqrt %22 : vector<16x1xf32>
    %24 = vector.broadcast %23 : vector<16x1xf32> to vector<16x32xf32>
    %25 = arith.mulf %20, %24 : vector<16x32xf32>
    %26 = vector.broadcast %5 : vector<1x32xf32> to vector<16x32xf32>
    %27 = arith.mulf %25, %26 : vector<16x32xf32>
    %28 = vector.broadcast %7 : vector<1x32xf32> to vector<16x32xf32>
    %29 = arith.addf %27, %28 : vector<16x32xf32>
    %30 = arith.truncf %29 : vector<16x32xf32> to vector<16x32xbf16>
    %c0_12 = arith.constant 0 : index
    %c0_13 = arith.constant 0 : index
    %c0_14 = arith.constant 0 : index
    %31 = vector.load %arg6[%c0_12, %c0_13, %c0_14] : memref<1x32x192xbf16, #tpu.memory_space<vmem>>, vector<1x32x192xbf16>
    %32 = vector.shape_cast %31 : vector<1x32x192xbf16> to vector<32x192xbf16>
    %cst_15 = arith.constant dense<0.000000e+00> : vector<16x192xf32>
    %33 = tpu.matmul %30, %32, %cst_15 {dimension_numbers = #tpu.dot_dimension_numbers<[1], [0], [0], [1], [0, 0, 1, 1], [], []>} : vector<16x32xbf16>, vector<32x192xbf16>, vector<16x192xf32> -> vector<16x192xf32>
    %34 = vector.extract_strided_slice %33 {offsets = [0, 0], sizes = [8, 16], strides = [1, 1]} : vector<16x192xf32> to vector<8x16xf32>
    %35 = vector.extract_strided_slice %33 {offsets = [0, 16], sizes = [8, 16], strides = [1, 1]} : vector<16x192xf32> to vector<8x16xf32>
    %36 = vector.extract_strided_slice %33 {offsets = [0, 32], sizes = [8, 16], strides = [1, 1]} : vector<16x192xf32> to vector<8x16xf32>
    %37 = vector.extract_strided_slice %33 {offsets = [0, 48], sizes = [8, 16], strides = [1, 1]} : vector<16x192xf32> to vector<8x16xf32>
    %38 = vector.extract_strided_slice %33 {offsets = [8, 0], sizes = [8, 16], strides = [1, 1]} : vector<16x192xf32> to vector<8x16xf32>
    %39 = vector.extract_strided_slice %33 {offsets = [8, 16], sizes = [8, 16], strides = [1, 1]} : vector<16x192xf32> to vector<8x16xf32>
    %40 = vector.extract_strided_slice %33 {offsets = [8, 32], sizes = [8, 16], strides = [1, 1]} : vector<16x192xf32> to vector<8x16xf32>
    %41 = vector.extract_strided_slice %33 {offsets = [8, 48], sizes = [8, 16], strides = [1, 1]} : vector<16x192xf32> to vector<8x16xf32>
    %42 = vector.shape_cast %34 : vector<8x16xf32> to vector<1x8x16xf32>
    %43 = vector.shape_cast %35 : vector<8x16xf32> to vector<1x8x16xf32>
    %44 = vector.shape_cast %36 : vector<8x16xf32> to vector<1x8x16xf32>
    %45 = vector.shape_cast %37 : vector<8x16xf32> to vector<1x8x16xf32>
    %46 = vector.shape_cast %38 : vector<8x16xf32> to vector<1x8x16xf32>
    %47 = vector.shape_cast %39 : vector<8x16xf32> to vector<1x8x16xf32>
    %48 = vector.shape_cast %40 : vector<8x16xf32> to vector<1x8x16xf32>
    %49 = vector.shape_cast %41 : vector<8x16xf32> to vector<1x8x16xf32>
    %50 = tpu.concatenate %42, %43, %44, %45, %46, %47, %48, %49 in 0 : vector<1x8x16xf32>, vector<1x8x16xf32>, vector<1x8x16xf32>, vector<1x8x16xf32>, vector<1x8x16xf32>, vector<1x8x16xf32>, vector<1x8x16xf32>, vector<1x8x16xf32> -> vector<8x8x16xf32>
    %51 = arith.truncf %50 : vector<8x8x16xf32> to vector<8x8x16xbf16>
    %52 = vector.extract_strided_slice %33 {offsets = [0, 64], sizes = [8, 16], strides = [1, 1]} : vector<16x192xf32> to vector<8x16xf32>
    %53 = vector.extract_strided_slice %33 {offsets = [0, 80], sizes = [8, 16], strides = [1, 1]} : vector<16x192xf32> to vector<8x16xf32>
    %54 = vector.extract_strided_slice %33 {offsets = [0, 96], sizes = [8, 16], strides = [1, 1]} : vector<16x192xf32> to vector<8x16xf32>
    %55 = vector.extract_strided_slice %33 {offsets = [0, 112], sizes = [8, 16], strides = [1, 1]} : vector<16x192xf32> to vector<8x16xf32>
    %56 = vector.extract_strided_slice %33 {offsets = [8, 64], sizes = [8, 16], strides = [1, 1]} : vector<16x192xf32> to vector<8x16xf32>
    %57 = vector.extract_strided_slice %33 {offsets = [8, 80], sizes = [8, 16], strides = [1, 1]} : vector<16x192xf32> to vector<8x16xf32>
    %58 = vector.extract_strided_slice %33 {offsets = [8, 96], sizes = [8, 16], strides = [1, 1]} : vector<16x192xf32> to vector<8x16xf32>
    %59 = vector.extract_strided_slice %33 {offsets = [8, 112], sizes = [8, 16], strides = [1, 1]} : vector<16x192xf32> to vector<8x16xf32>
    %60 = vector.shape_cast %52 : vector<8x16xf32> to vector<1x8x16xf32>
    %61 = vector.shape_cast %53 : vector<8x16xf32> to vector<1x8x16xf32>
    %62 = vector.shape_cast %54 : vector<8x16xf32> to vector<1x8x16xf32>
    %63 = vector.shape_cast %55 : vector<8x16xf32> to vector<1x8x16xf32>
    %64 = vector.shape_cast %56 : vector<8x16xf32> to vector<1x8x16xf32>
    %65 = vector.shape_cast %57 : vector<8x16xf32> to vector<1x8x16xf32>
    %66 = vector.shape_cast %58 : vector<8x16xf32> to vector<1x8x16xf32>
    %67 = vector.shape_cast %59 : vector<8x16xf32> to vector<1x8x16xf32>
    %68 = tpu.concatenate %60, %61, %62, %63, %64, %65, %66, %67 in 0 : vector<1x8x16xf32>, vector<1x8x16xf32>, vector<1x8x16xf32>, vector<1x8x16xf32>, vector<1x8x16xf32>, vector<1x8x16xf32>, vector<1x8x16xf32>, vector<1x8x16xf32> -> vector<8x8x16xf32>
    %69 = arith.truncf %68 : vector<8x8x16xf32> to vector<8x8x16xbf16>
    %70 = vector.extract_strided_slice %33 {offsets = [0, 128], sizes = [8, 16], strides = [1, 1]} : vector<16x192xf32> to vector<8x16xf32>
    %71 = vector.extract_strided_slice %33 {offsets = [0, 144], sizes = [8, 16], strides = [1, 1]} : vector<16x192xf32> to vector<8x16xf32>
    %72 = vector.extract_strided_slice %33 {offsets = [0, 160], sizes = [8, 16], strides = [1, 1]} : vector<16x192xf32> to vector<8x16xf32>
    %73 = vector.extract_strided_slice %33 {offsets = [0, 176], sizes = [8, 16], strides = [1, 1]} : vector<16x192xf32> to vector<8x16xf32>
    %74 = vector.extract_strided_slice %33 {offsets = [8, 128], sizes = [8, 16], strides = [1, 1]} : vector<16x192xf32> to vector<8x16xf32>
    %75 = vector.extract_strided_slice %33 {offsets = [8, 144], sizes = [8, 16], strides = [1, 1]} : vector<16x192xf32> to vector<8x16xf32>
    %76 = vector.extract_strided_slice %33 {offsets = [8, 160], sizes = [8, 16], strides = [1, 1]} : vector<16x192xf32> to vector<8x16xf32>
    %77 = vector.extract_strided_slice %33 {offsets = [8, 176], sizes = [8, 16], strides = [1, 1]} : vector<16x192xf32> to vector<8x16xf32>
    %78 = vector.shape_cast %70 : vector<8x16xf32> to vector<1x8x16xf32>
    %79 = vector.shape_cast %71 : vector<8x16xf32> to vector<1x8x16xf32>
    %80 = vector.shape_cast %72 : vector<8x16xf32> to vector<1x8x16xf32>
    %81 = vector.shape_cast %73 : vector<8x16xf32> to vector<1x8x16xf32>
    %82 = vector.shape_cast %74 : vector<8x16xf32> to vector<1x8x16xf32>
    %83 = vector.shape_cast %75 : vector<8x16xf32> to vector<1x8x16xf32>
    %84 = vector.shape_cast %76 : vector<8x16xf32> to vector<1x8x16xf32>
    %85 = vector.shape_cast %77 : vector<8x16xf32> to vector<1x8x16xf32>
    %86 = tpu.concatenate %78, %79, %80, %81, %82, %83, %84, %85 in 0 : vector<1x8x16xf32>, vector<1x8x16xf32>, vector<1x8x16xf32>, vector<1x8x16xf32>, vector<1x8x16xf32>, vector<1x8x16xf32>, vector<1x8x16xf32>, vector<1x8x16xf32> -> vector<8x8x16xf32>
    %87 = arith.truncf %86 : vector<8x8x16xf32> to vector<8x8x16xbf16>
    "tpu.trace_start"() <{level = 10 : i32, message = "bqd,bkd->bqk"}> : () -> ()
    %cst_16 = arith.constant dense<0.000000e+00> : vector<8x8x8xf32>
    %88 = tpu.matmul %51, %69, %cst_16 {dimension_numbers = #tpu.dot_dimension_numbers<[2], [2], [1], [1], [0, 0, 0, 1, 1, 1], [0], [0]>} : vector<8x8x16xbf16>, vector<8x8x16xbf16>, vector<8x8x8xf32> -> vector<8x8x8xf32>
    "tpu.trace_stop"() : () -> ()
    %cst_17 = arith.constant dense<0xFF800000> : vector<8x8xf32>
    %89 = vector.multi_reduction <maximumf>, %88, %cst_17 [2] : vector<8x8x8xf32> to vector<8x8xf32>
    %90 = vector.shape_cast %89 : vector<8x8xf32> to vector<8x8x1xf32>
    %91 = vector.broadcast %90 : vector<8x8x1xf32> to vector<8x8x8xf32>
    %92 = arith.subf %88, %91 : vector<8x8x8xf32>
    %93 = math.exp %92 : vector<8x8x8xf32>
    %cst_18 = arith.constant dense<0.000000e+00> : vector<8x8xf32>
    %94 = vector.multi_reduction <add>, %93, %cst_18 [2] : vector<8x8x8xf32> to vector<8x8xf32>
    %95 = vector.shape_cast %94 : vector<8x8xf32> to vector<8x8x1xf32>
    %96 = tpu.reciprocal %95 {approx = true} : vector<8x8x1xf32> -> vector<8x8x1xf32>
    %97 = arith.truncf %93 : vector<8x8x8xf32> to vector<8x8x8xbf16>
    "tpu.trace_start"() <{level = 10 : i32, message = "bqk,bkd->bqd"}> : () -> ()
    %cst_19 = arith.constant dense<0.000000e+00> : vector<8x8x16xf32>
    %98 = tpu.matmul %97, %87, %cst_19 {dimension_numbers = #tpu.dot_dimension_numbers<[2], [1], [1], [2], [0, 0, 0, 1, 1, 2], [0], [0]>} : vector<8x8x8xbf16>, vector<8x8x16xbf16>, vector<8x8x16xf32> -> vector<8x8x16xf32>
    "tpu.trace_stop"() : () -> ()
    %99 = vector.broadcast %96 : vector<8x8x1xf32> to vector<8x8x16xf32>
    %100 = arith.mulf %98, %99 : vector<8x8x16xf32>
    %101 = vector.extract_strided_slice %100 {offsets = [0, 0, 0], sizes = [1, 8, 16], strides = [1, 1, 1]} : vector<8x8x16xf32> to vector<1x8x16xf32>
    %102 = vector.shape_cast %101 : vector<1x8x16xf32> to vector<8x16xf32>
    %103 = vector.extract_strided_slice %100 {offsets = [1, 0, 0], sizes = [1, 8, 16], strides = [1, 1, 1]} : vector<8x8x16xf32> to vector<1x8x16xf32>
    %104 = vector.shape_cast %103 : vector<1x8x16xf32> to vector<8x16xf32>
    %105 = vector.extract_strided_slice %100 {offsets = [2, 0, 0], sizes = [1, 8, 16], strides = [1, 1, 1]} : vector<8x8x16xf32> to vector<1x8x16xf32>
    %106 = vector.shape_cast %105 : vector<1x8x16xf32> to vector<8x16xf32>
    %107 = vector.extract_strided_slice %100 {offsets = [3, 0, 0], sizes = [1, 8, 16], strides = [1, 1, 1]} : vector<8x8x16xf32> to vector<1x8x16xf32>
    %108 = vector.shape_cast %107 : vector<1x8x16xf32> to vector<8x16xf32>
    %109 = tpu.concatenate %102, %104, %106, %108 in 1 : vector<8x16xf32>, vector<8x16xf32>, vector<8x16xf32>, vector<8x16xf32> -> vector<8x64xf32>
    %110 = vector.extract_strided_slice %100 {offsets = [4, 0, 0], sizes = [1, 8, 16], strides = [1, 1, 1]} : vector<8x8x16xf32> to vector<1x8x16xf32>
    %111 = vector.shape_cast %110 : vector<1x8x16xf32> to vector<8x16xf32>
    %112 = vector.extract_strided_slice %100 {offsets = [5, 0, 0], sizes = [1, 8, 16], strides = [1, 1, 1]} : vector<8x8x16xf32> to vector<1x8x16xf32>
    %113 = vector.shape_cast %112 : vector<1x8x16xf32> to vector<8x16xf32>
    %114 = vector.extract_strided_slice %100 {offsets = [6, 0, 0], sizes = [1, 8, 16], strides = [1, 1, 1]} : vector<8x8x16xf32> to vector<1x8x16xf32>
    %115 = vector.shape_cast %114 : vector<1x8x16xf32> to vector<8x16xf32>
    %116 = vector.extract_strided_slice %100 {offsets = [7, 0, 0], sizes = [1, 8, 16], strides = [1, 1, 1]} : vector<8x8x16xf32> to vector<1x8x16xf32>
    %117 = vector.shape_cast %116 : vector<1x8x16xf32> to vector<8x16xf32>
    %118 = tpu.concatenate %111, %113, %115, %117 in 1 : vector<8x16xf32>, vector<8x16xf32>, vector<8x16xf32>, vector<8x16xf32> -> vector<8x64xf32>
    %119 = tpu.concatenate %109, %118 in 0 : vector<8x64xf32>, vector<8x64xf32> -> vector<16x64xf32>
    %120 = arith.truncf %119 : vector<16x64xf32> to vector<16x64xbf16>
    %c0_20 = arith.constant 0 : index
    %c0_21 = arith.constant 0 : index
    %c0_22 = arith.constant 0 : index
    %121 = vector.load %arg7[%c0_20, %c0_21, %c0_22] : memref<1x64x32xbf16, #tpu.memory_space<vmem>>, vector<1x64x32xbf16>
    %122 = vector.shape_cast %121 : vector<1x64x32xbf16> to vector<64x32xbf16>
    %cst_23 = arith.constant dense<0.000000e+00> : vector<16x32xf32>
    %123 = tpu.matmul %120, %122, %cst_23 {dimension_numbers = #tpu.dot_dimension_numbers<[1], [0], [0], [1], [0, 0, 1, 1], [], []>} : vector<16x64xbf16>, vector<64x32xbf16>, vector<16x32xf32> -> vector<16x32xf32>
    %c0_24 = arith.constant 0 : index
    %c0_25 = arith.constant 0 : index
    %c0_26 = arith.constant 0 : index
    %124 = vector.load %arg8[%c0_24, %c0_25, %c0_26] : memref<1x1x32xf32, #tpu.memory_space<vmem>>, vector<1x1x32xf32>
    %125 = vector.shape_cast %124 : vector<1x1x32xf32> to vector<1x32xf32>
    %126 = vector.broadcast %125 : vector<1x32xf32> to vector<16x32xf32>
    %127 = arith.addf %123, %126 : vector<16x32xf32>
    %128 = arith.addf %3, %127 : vector<16x32xf32>
    %c0_27 = arith.constant 0 : index
    %c0_28 = arith.constant 0 : index
    %c0_29 = arith.constant 0 : index
    %129 = vector.load %arg9[%c0_27, %c0_28, %c0_29] : memref<1x1x32xf32, #tpu.memory_space<vmem>>, vector<1x1x32xf32>
    %130 = vector.shape_cast %129 : vector<1x1x32xf32> to vector<1x32xf32>
    %c0_30 = arith.constant 0 : index
    %c0_31 = arith.constant 0 : index
    %c0_32 = arith.constant 0 : index
    %131 = vector.load %arg10[%c0_30, %c0_31, %c0_32] : memref<1x1x32xf32, #tpu.memory_space<vmem>>, vector<1x1x32xf32>
    %132 = vector.shape_cast %131 : vector<1x1x32xf32> to vector<1x32xf32>
    %cst_33 = arith.constant dense<0.000000e+00> : vector<16xf32>
    %133 = vector.multi_reduction <add>, %128, %cst_33 [1] : vector<16x32xf32> to vector<16xf32>
    %134 = vector.shape_cast %133 : vector<16xf32> to vector<16x1xf32>
    %cst_34 = arith.constant 3.200000e+01 : f32
    %135 = vector.broadcast %cst_34 : f32 to vector<16x1xf32>
    %136 = arith.divf %134, %135 : vector<16x1xf32>
    %137 = vector.broadcast %136 : vector<16x1xf32> to vector<16x32xf32>
    %138 = arith.subf %128, %137 : vector<16x32xf32>
    %139 = arith.mulf %138, %138 : vector<16x32xf32>
    %cst_35 = arith.constant dense<0.000000e+00> : vector<16xf32>
    %140 = vector.multi_reduction <add>, %139, %cst_35 [1] : vector<16x32xf32> to vector<16xf32>
    %141 = vector.shape_cast %140 : vector<16xf32> to vector<16x1xf32>
    %cst_36 = arith.constant 3.200000e+01 : f32
    %142 = vector.broadcast %cst_36 : f32 to vector<16x1xf32>
    %143 = arith.divf %141, %142 : vector<16x1xf32>
    %144 = vector.broadcast %136 : vector<16x1xf32> to vector<16x32xf32>
    %145 = arith.subf %128, %144 : vector<16x32xf32>
    %cst_37 = arith.constant 9.99999974E-6 : f32
    %146 = vector.broadcast %cst_37 : f32 to vector<16x1xf32>
    %147 = arith.addf %143, %146 : vector<16x1xf32>
    %148 = math.rsqrt %147 : vector<16x1xf32>
    %149 = vector.broadcast %148 : vector<16x1xf32> to vector<16x32xf32>
    %150 = arith.mulf %145, %149 : vector<16x32xf32>
    %151 = vector.broadcast %130 : vector<1x32xf32> to vector<16x32xf32>
    %152 = arith.mulf %150, %151 : vector<16x32xf32>
    %153 = vector.broadcast %132 : vector<1x32xf32> to vector<16x32xf32>
    %154 = arith.addf %152, %153 : vector<16x32xf32>
    %155 = arith.truncf %154 : vector<16x32xf32> to vector<16x32xbf16>
    %c0_38 = arith.constant 0 : index
    %c0_39 = arith.constant 0 : index
    %c0_40 = arith.constant 0 : index
    %156 = vector.load %arg11[%c0_38, %c0_39, %c0_40] : memref<1x32x64xbf16, #tpu.memory_space<vmem>>, vector<1x32x64xbf16>
    %157 = vector.shape_cast %156 : vector<1x32x64xbf16> to vector<32x64xbf16>
    %cst_41 = arith.constant dense<0.000000e+00> : vector<16x64xf32>
    %158 = tpu.matmul %155, %157, %cst_41 {dimension_numbers = #tpu.dot_dimension_numbers<[1], [0], [0], [1], [0, 0, 1, 1], [], []>} : vector<16x32xbf16>, vector<32x64xbf16>, vector<16x64xf32> -> vector<16x64xf32>
    %c0_42 = arith.constant 0 : index
    %c0_43 = arith.constant 0 : index
    %c0_44 = arith.constant 0 : index
    %159 = vector.load %arg12[%c0_42, %c0_43, %c0_44] : memref<1x1x64xf32, #tpu.memory_space<vmem>>, vector<1x1x64xf32>
    %160 = vector.shape_cast %159 : vector<1x1x64xf32> to vector<1x64xf32>
    %161 = vector.broadcast %160 : vector<1x64xf32> to vector<16x64xf32>
    %162 = arith.addf %158, %161 : vector<16x64xf32>
    %cst_45 = arith.constant 5.000000e-01 : f32
    %163 = vector.broadcast %cst_45 : f32 to vector<16x64xf32>
    %164 = arith.mulf %163, %162 : vector<16x64xf32>
    %cst_46 = arith.constant 4.471500e-02 : f32
    %165 = vector.broadcast %cst_46 : f32 to vector<16x64xf32>
    %166 = arith.mulf %165, %162 : vector<16x64xf32>
    %167 = arith.mulf %166, %162 : vector<16x64xf32>
    %168 = arith.mulf %167, %162 : vector<16x64xf32>
    %169 = arith.addf %162, %168 : vector<16x64xf32>
    %cst_47 = arith.constant 0.797884583 : f32
    %170 = vector.broadcast %cst_47 : f32 to vector<16x64xf32>
    %171 = arith.mulf %170, %169 : vector<16x64xf32>
    %172 = math.tanh %171 : vector<16x64xf32>
    %cst_48 = arith.constant 1.000000e+00 : f32
    %173 = vector.broadcast %cst_48 : f32 to vector<16x64xf32>
    %174 = arith.addf %173, %172 : vector<16x64xf32>
    %175 = arith.mulf %164, %174 : vector<16x64xf32>
    %176 = arith.truncf %175 : vector<16x64xf32> to vector<16x64xbf16>
    %c0_49 = arith.constant 0 : index
    %c0_50 = arith.constant 0 : index
    %c0_51 = arith.constant 0 : index
    %177 = vector.load %arg13[%c0_49, %c0_50, %c0_51] : memref<1x64x32xbf16, #tpu.memory_space<vmem>>, vector<1x64x32xbf16>
    %178 = vector.shape_cast %177 : vector<1x64x32xbf16> to vector<64x32xbf16>
    %cst_52 = arith.constant dense<0.000000e+00> : vector<16x32xf32>
    %179 = tpu.matmul %176, %178, %cst_52 {dimension_numbers = #tpu.dot_dimension_numbers<[1], [0], [0], [1], [0, 0, 1, 1], [], []>} : vector<16x64xbf16>, vector<64x32xbf16>, vector<16x32xf32> -> vector<16x32xf32>
    %c0_53 = arith.constant 0 : index
    %c0_54 = arith.constant 0 : index
    %c0_55 = arith.constant 0 : index
    %180 = vector.load %arg14[%c0_53, %c0_54, %c0_55] : memref<1x1x32xf32, #tpu.memory_space<vmem>>, vector<1x1x32xf32>
    %181 = vector.shape_cast %180 : vector<1x1x32xf32> to vector<1x32xf32>
    %182 = vector.broadcast %181 : vector<1x32xf32> to vector<16x32xf32>
    %183 = arith.addf %179, %182 : vector<16x32xf32>
    %184 = arith.addf %128, %183 : vector<16x32xf32>
    %c0_56 = arith.constant 0 : index
    %c0_57 = arith.constant 0 : index
    %185 = vector.load %arg18[%c0_56, %c0_57] : memref<16x32xf32, #tpu.memory_space<vmem>>, vector<16x32xf32>
    tpu.vector_store %arg18[%c0_56, %c0_57], %184 {strides = array<i32>} : memref<16x32xf32, #tpu.memory_space<vmem>>, vector<16x32xf32>,
    %c1_i32 = arith.constant 1 : i32
    %186 = arith.cmpi eq, %arg1, %c1_i32 : i32
    %187 = arith.extui %186 : i1 to i32
    %c0_i32_58 = arith.constant 0 : i32
    %188 = arith.cmpi ne, %187, %c0_i32_58 : i32
    scf.if %188 {
      %c0_59 = arith.constant 0 : index
      %c0_60 = arith.constant 0 : index
      %189 = vector.load %arg15[%c0_59, %c0_60] : memref<1x32xf32, #tpu.memory_space<vmem>>, vector<1x32xf32>
      %c0_61 = arith.constant 0 : index
      %c0_62 = arith.constant 0 : index
      %190 = vector.load %arg16[%c0_61, %c0_62] : memref<1x32xf32, #tpu.memory_space<vmem>>, vector<1x32xf32>
      %cst_63 = arith.constant dense<0.000000e+00> : vector<16xf32>
      %191 = vector.multi_reduction <add>, %184, %cst_63 [1] : vector<16x32xf32> to vector<16xf32>
      %192 = vector.shape_cast %191 : vector<16xf32> to vector<16x1xf32>
      %cst_64 = arith.constant 3.200000e+01 : f32
      %193 = vector.broadcast %cst_64 : f32 to vector<16x1xf32>
      %194 = arith.divf %192, %193 : vector<16x1xf32>
      %195 = vector.broadcast %194 : vector<16x1xf32> to vector<16x32xf32>
      %196 = arith.subf %184, %195 : vector<16x32xf32>
      %197 = arith.mulf %196, %196 : vector<16x32xf32>
      %cst_65 = arith.constant dense<0.000000e+00> : vector<16xf32>
      %198 = vector.multi_reduction <add>, %197, %cst_65 [1] : vector<16x32xf32> to vector<16xf32>
      %199 = vector.shape_cast %198 : vector<16xf32> to vector<16x1xf32>
      %cst_66 = arith.constant 3.200000e+01 : f32
      %200 = vector.broadcast %cst_66 : f32 to vector<16x1xf32>
      %201 = arith.divf %199, %200 : vector<16x1xf32>
      %202 = vector.broadcast %194 : vector<16x1xf32> to vector<16x32xf32>
      %203 = arith.subf %184, %202 : vector<16x32xf32>
      %cst_67 = arith.constant 9.99999974E-6 : f32
      %204 = vector.broadcast %cst_67 : f32 to vector<16x1xf32>
      %205 = arith.addf %201, %204 : vector<16x1xf32>
      %206 = math.rsqrt %205 : vector<16x1xf32>
      %207 = vector.broadcast %206 : vector<16x1xf32> to vector<16x32xf32>
      %208 = arith.mulf %203, %207 : vector<16x32xf32>
      %209 = vector.broadcast %189 : vector<1x32xf32> to vector<16x32xf32>
      %210 = arith.mulf %208, %209 : vector<16x32xf32>
      %211 = vector.broadcast %190 : vector<1x32xf32> to vector<16x32xf32>
      %212 = arith.addf %210, %211 : vector<16x32xf32>
      %213 = vector.extract_strided_slice %212 {offsets = [0, 0], sizes = [8, 32], strides = [1, 1]} : vector<16x32xf32> to vector<8x32xf32>
      %c0_68 = arith.constant 0 : index
      %c0_69 = arith.constant 0 : index
      %c0_70 = arith.constant 0 : index
      %214 = vector.load %arg17[%c0_68, %c0_69, %c0_70] : memref<2x8x32xf32, #tpu.memory_space<vmem>>, vector<1x8x32xf32>
      %215 = vector.shape_cast %214 : vector<1x8x32xf32> to vector<8x32xf32>
      %216 = vector.shape_cast %213 : vector<8x32xf32> to vector<1x8x32xf32>
      tpu.vector_store %arg17[%c0_68, %c0_69, %c0_70], %216 {strides = array<i32>} : memref<2x8x32xf32, #tpu.memory_space<vmem>>, vector<1x8x32xf32>,
      %217 = vector.extract_strided_slice %212 {offsets = [8, 0], sizes = [8, 32], strides = [1, 1]} : vector<16x32xf32> to vector<8x32xf32>
      %c1 = arith.constant 1 : index
      %c0_71 = arith.constant 0 : index
      %c0_72 = arith.constant 0 : index
      %218 = vector.load %arg17[%c1, %c0_71, %c0_72] : memref<2x8x32xf32, #tpu.memory_space<vmem>>, vector<1x8x32xf32>
      %219 = vector.shape_cast %218 : vector<1x8x32xf32> to vector<8x32xf32>
      %220 = vector.shape_cast %217 : vector<8x32xf32> to vector<1x8x32xf32>
      tpu.vector_store %arg17[%c1, %c0_71, %c0_72], %220 {strides = array<i32>} : memref<2x8x32xf32, #tpu.memory_space<vmem>>, vector<1x8x32xf32>,
    } else {
    }
    return
  }
  func.func @transform_0(%arg0: i32, %arg1: i32) -> (i32, i32, i32) {
    %c0_i32 = arith.constant 0 : i32
    %c0_i32_0 = arith.constant 0 : i32
    %c0_i32_1 = arith.constant 0 : i32
    return %arg0, %c0_i32, %c0_i32_0 : i32, i32, i32
  }
  func.func @transform_1(%arg0: i32, %arg1: i32) -> (i32, i32, i32) {
    %c0_i32 = arith.constant 0 : i32
    %c0_i32_0 = arith.constant 0 : i32
    %c0_i32_1 = arith.constant 0 : i32
    %c0_i32_2 = arith.constant 0 : i32
    return %c0_i32, %c0_i32_0, %c0_i32_1 : i32, i32, i32
  }
  func.func @transform_2(%arg0: i32, %arg1: i32) -> (i32, i32, i32) {
    %c0_i32 = arith.constant 0 : i32
    %c0_i32_0 = arith.constant 0 : i32
    %c0_i32_1 = arith.constant 0 : i32
    return %arg1, %c0_i32, %c0_i32_0 : i32, i32, i32
  }
  func.func @transform_3(%arg0: i32, %arg1: i32) -> (i32, i32, i32) {
    %c0_i32 = arith.constant 0 : i32
    %c0_i32_0 = arith.constant 0 : i32
    %c0_i32_1 = arith.constant 0 : i32
    return %arg1, %c0_i32, %c0_i32_0 : i32, i32, i32
  }
  func.func @transform_4(%arg0: i32, %arg1: i32) -> (i32, i32, i32) {
    %c0_i32 = arith.constant 0 : i32
    %c0_i32_0 = arith.constant 0 : i32
    %c0_i32_1 = arith.constant 0 : i32
    return %arg1, %c0_i32, %c0_i32_0 : i32, i32, i32
  }
  func.func @transform_5(%arg0: i32, %arg1: i32) -> (i32, i32, i32) {
    %c0_i32 = arith.constant 0 : i32
    %c0_i32_0 = arith.constant 0 : i32
    %c0_i32_1 = arith.constant 0 : i32
    return %arg1, %c0_i32, %c0_i32_0 : i32, i32, i32
  }
  func.func @transform_6(%arg0: i32, %arg1: i32) -> (i32, i32, i32) {
    %c0_i32 = arith.constant 0 : i32
    %c0_i32_0 = arith.constant 0 : i32
    %c0_i32_1 = arith.constant 0 : i32
    return %arg1, %c0_i32, %c0_i32_0 : i32, i32, i32
  }
  func.func @transform_7(%arg0: i32, %arg1: i32) -> (i32, i32, i32) {
    %c0_i32 = arith.constant 0 : i32
    %c0_i32_0 = arith.constant 0 : i32
    %c0_i32_1 = arith.constant 0 : i32
    return %arg1, %c0_i32, %c0_i32_0 : i32, i32, i32
  }
  func.func @transform_8(%arg0: i32, %arg1: i32) -> (i32, i32, i32) {
    %c0_i32 = arith.constant 0 : i32
    %c0_i32_0 = arith.constant 0 : i32
    %c0_i32_1 = arith.constant 0 : i32
    return %arg1, %c0_i32, %c0_i32_0 : i32, i32, i32
  }
  func.func @transform_9(%arg0: i32, %arg1: i32) -> (i32, i32, i32) {
    %c0_i32 = arith.constant 0 : i32
    %c0_i32_0 = arith.constant 0 : i32
    %c0_i32_1 = arith.constant 0 : i32
    return %arg1, %c0_i32, %c0_i32_0 : i32, i32, i32
  }
  func.func @transform_10(%arg0: i32, %arg1: i32) -> (i32, i32, i32) {
    %c0_i32 = arith.constant 0 : i32
    %c0_i32_0 = arith.constant 0 : i32
    %c0_i32_1 = arith.constant 0 : i32
    return %arg1, %c0_i32, %c0_i32_0 : i32, i32, i32
  }
  func.func @transform_11(%arg0: i32, %arg1: i32) -> (i32, i32, i32) {
    %c0_i32 = arith.constant 0 : i32
    %c0_i32_0 = arith.constant 0 : i32
    %c0_i32_1 = arith.constant 0 : i32
    return %arg1, %c0_i32, %c0_i32_0 : i32, i32, i32
  }
  func.func @transform_12(%arg0: i32, %arg1: i32) -> (i32, i32, i32) {
    %c0_i32 = arith.constant 0 : i32
    %c0_i32_0 = arith.constant 0 : i32
    %c0_i32_1 = arith.constant 0 : i32
    return %arg1, %c0_i32, %c0_i32_0 : i32, i32, i32
  }
  func.func @transform_13(%arg0: i32, %arg1: i32) -> (i32, i32) {
    %c0_i32 = arith.constant 0 : i32
    %c0_i32_0 = arith.constant 0 : i32
    %c0_i32_1 = arith.constant 0 : i32
    return %c0_i32, %c0_i32_0 : i32, i32
  }
  func.func @transform_14(%arg0: i32, %arg1: i32) -> (i32, i32) {
    %c0_i32 = arith.constant 0 : i32
    %c0_i32_0 = arith.constant 0 : i32
    %c0_i32_1 = arith.constant 0 : i32
    return %c0_i32, %c0_i32_0 : i32, i32
  }
  func.func @transform_15(%arg0: i32, %arg1: i32) -> (i32, i32, i32) {
    %c0_i32 = arith.constant 0 : i32
    %c0_i32_0 = arith.constant 0 : i32
    %c0_i32_1 = arith.constant 0 : i32
    return %arg0, %c0_i32, %c0_i32_0 : i32, i32, i32
  }
}

</mosaic_0001>

<llo_original>
// kernel: tpu_custom_call.1
$region0: #{tpu_custom_call.1}
  #allocation0 [shape = 'u32[]', space=smem, size = 0x4, offset = 0x4, fixed_abs, tag = 'smem constant byte address 0x4 - core index']
  #allocation1 [shape = 'u32[144,128]{1,0:T(1,128)}', space=vmem, size = 0x12000, scoped, tag = 'internal scratch']
  #allocation2 [shape = 'f32[16,32]{1,0:T(8,128)}', space=vmem, size = 0x2000, scoped, tag = 'scratch operand']
  %s0 = inlined_call_operand.vmem [shape: f32[2,8,32], index: 0, kind: input, shape index: {}]
  %s1 = inlined_call_operand.vmem [shape: f32[1,8,32], index: 1, kind: input, shape index: {}]
  %s2 = inlined_call_operand.vmem [shape: f32[2,1,32], index: 2, kind: input, shape index: {}]
  %s3 = inlined_call_operand.vmem [shape: f32[2,1,32], index: 3, kind: input, shape index: {}]
  %s4 = inlined_call_operand.vmem [shape: bf16[2,32,192], index: 4, kind: input, shape index: {}]
  %s5 = inlined_call_operand.vmem [shape: bf16[2,64,32], index: 5, kind: input, shape index: {}]
  %s6 = inlined_call_operand.vmem [shape: f32[2,1,32], index: 6, kind: input, shape index: {}]
  %s7 = inlined_call_operand.vmem [shape: f32[2,1,32], index: 7, kind: input, shape index: {}]
  %s8 = inlined_call_operand.vmem [shape: f32[2,1,32], index: 8, kind: input, shape index: {}]
  %s9 = inlined_call_operand.vmem [shape: bf16[2,32,64], index: 9, kind: input, shape index: {}]
  %s10 = inlined_call_operand.vmem [shape: f32[2,1,64], index: 10, kind: input, shape index: {}]
  %s11 = inlined_call_operand.vmem [shape: bf16[2,64,32], index: 11, kind: input, shape index: {}]
  %s12 = inlined_call_operand.vmem [shape: f32[2,1,32], index: 12, kind: input, shape index: {}]
  %s13 = inlined_call_operand.vmem [shape: f32[1,32], index: 13, kind: input, shape index: {}]
  %s14 = inlined_call_operand.vmem [shape: f32[1,32], index: 14, kind: input, shape index: {}]
  %s15 = inlined_call_operand.hbm [shape: f32[2,8,32], index: 15, kind: output, shape index: {}]
  %s16 = sld [smem:[#allocation0]]
  $region101: #{tpu_custom_call.1} parent=0
    _
  %s18 = ssub.s32 1, %s16
  %s19 = scalar_select 0, %s18, %s16
  $region1: #{tpu_custom_call.1} parent=0
    #allocation3 [shape = 'u8[8192]{0}', space=vmem, size = 0x2000, scoped, tag = 'output window, operand 0, single buffered']
    #allocation4 [shape = 's32[2]{0}', space=sflag, size = 0x8, scoped, tag = 'scoped memory for tpu_custom_call.1']
    %20 = vsyncpa [#allocation4], 0
    loop: start=0, step=1, limit=4
    $region2: #{tpu_custom_call.1} parent=1 // loop_pre_header
      _
    $region3: #{tpu_custom_call.1} parent=1 // loop_header
      %s22 = sphi 0, %s26
      %p23 = scmp.ge.s32.totalorder %s22, 4
      %s29 = sphi 0, %s41
      %s30 = sphi 0, %s37
      %s31 = sphi 0, %s29
      %s32 = sphi 0, %s30
      %s33 = sphi 0, %s31
      %s34 = sphi 0, %s32
      %s44 = sphi 0, %s46
      %s47 = sphi 0, %s44
      %s48 = sphi 0, %s47
      %s64 = sphi 0, %s48
      %s68 = sphi 0, %s68
      %s70 = sphi 0, %s68
      %s71 = sphi 0, %s70
      %s85 = sphi 0, %s71
      %s91 = sphi 0, %s93
      %s94 = sphi 0, %s91
      %s95 = sphi 0, %s94
      %s111 = sphi 0, %s95
      %s117 = sphi 0, %s119
      %s120 = sphi 0, %s117
      %s121 = sphi 0, %s120
      %s137 = sphi 0, %s121
      %s143 = sphi 0, %s145
      %s146 = sphi 0, %s143
      %s147 = sphi 0, %s146
      %s163 = sphi 0, %s147
      %s169 = sphi 0, %s171
      %s172 = sphi 0, %s169
      %s173 = sphi 0, %s172
      %s189 = sphi 0, %s173
      %s195 = sphi 0, %s197
      %s198 = sphi 0, %s195
      %s199 = sphi 0, %s198
      %s215 = sphi 0, %s199
      %s221 = sphi 0, %s223
      %s224 = sphi 0, %s221
      %s225 = sphi 0, %s224
      %s241 = sphi 0, %s225
      %s247 = sphi 0, %s249
      %s250 = sphi 0, %s247
      %s251 = sphi 0, %s250
      %s267 = sphi 0, %s251
      %s273 = sphi 0, %s275
      %s276 = sphi 0, %s273
      %s277 = sphi 0, %s276
      %s293 = sphi 0, %s277
      %s299 = sphi 0, %s301
      %s302 = sphi 0, %s299
      %s303 = sphi 0, %s302
      %s319 = sphi 0, %s303
      %s325 = sphi 0, %s327
      %s328 = sphi 0, %s325
      %s329 = sphi 0, %s328
      %s345 = sphi 0, %s329
      %s351 = sphi 0, %s353
      %s354 = sphi 0, %s351
      %s355 = sphi 0, %s354
      %s371 = sphi 0, %s355
      %s375 = sphi 0, %s375
      %s377 = sphi 0, %s375
      %s378 = sphi 0, %s377
      %s392 = sphi 0, %s378
      %s396 = sphi 0, %s396
      %s398 = sphi 0, %s396
      %s399 = sphi 0, %s398
      %s413 = sphi 0, %s399
      %s419 = sphi 0, %s421
      %s422 = sphi 0, %s419
      %s423 = sphi 0, %s422
      %s439 = sphi 0, %s423
    $region4: #{tpu_custom_call.1} parent=1 // loop_header_branch
      %25 = sbr.rel (%p23) target = $region8
    $region5: #{tpu_custom_call.1} parent=1 // loop_body
      %s27 = ssub.s32 %s22, 1
      %s28 = ssub.s32 %s22, 2
      %s35 = sadd.s32 1, %s30
      %p36 = scmp.ge.s32.totalorder %s35, 2
      %s37 = scalar_select %p36, 0, %s35
      %s38 = sadd.s32 1, %s29
      %s39 = scalar_select %p36, %s38, %s29
      %p40 = scmp.ge.s32.totalorder %s39, 1
      %s41 = scalar_select %p40, 0, %s39
      %s42 = ssub.s32 %s29, %s41
      %p43 = scmp.eq.s32.totalorder %s42, 0
      %s45 = sadd.s32 %s44, 1
      %s46 = scalar_select %p43, %s44, %s45
      %p49 = pneg %p43
      %p50 = scmp.eq.s32.totalorder %s22, 1
      %p51 = por %p49, %p50
      %p52 = scmp.ne.s32.totalorder %s44, %s47
      %p53 = scmp.eq.s32.totalorder %s22, 0
      %p54 = por %p52, %p53
      %p55 = scmp.ne.s32.totalorder %s44, %s47
      %p56 = scmp.eq.s32.totalorder %s27, 1
      %p57 = por %p55, %p56
      %p58 = scmp.ne.s32.totalorder %s47, %s48
      %p59 = scmp.eq.s32.totalorder %s27, 0
      %p60 = por %p58, %p59
      %p61 = scmp.ne.s32.totalorder %s47, %s48
      %p62 = scmp.eq.s32.totalorder %s28, 1
      %p63 = por %p61, %p62
      %p65 = scmp.ne.s32.totalorder %s48, %s64
      %p66 = scmp.eq.s32.totalorder %s28, 0
      %p67 = por %p65, %p66
      %s69 = sadd.s32 %s68, 1
      %p72 = scmp.eq.s32.totalorder %s22, 1
      %p73 = scmp.ne.s32.totalorder %s68, %s70
      %p74 = scmp.eq.s32.totalorder %s22, 0
      %p75 = por %p73, %p74
      %p76 = scmp.ne.s32.totalorder %s68, %s70
      %p77 = scmp.eq.s32.totalorder %s27, 1
      %p78 = por %p76, %p77
      %p79 = scmp.ne.s32.totalorder %s70, %s71
      %p80 = scmp.eq.s32.totalorder %s27, 0
      %p81 = por %p79, %p80
      %p82 = scmp.ne.s32.totalorder %s70, %s71
      %p83 = scmp.eq.s32.totalorder %s28, 1
      %p84 = por %p82, %p83
      %p86 = scmp.ne.s32.totalorder %s71, %s85
      %p87 = scmp.eq.s32.totalorder %s28, 0
      %p88 = por %p86, %p87
      %s89 = ssub.s32 %s30, %s37
      %p90 = scmp.eq.s32.totalorder %s89, 0
      %s92 = sadd.s32 %s91, 1
      %s93 = scalar_select %p90, %s91, %s92
      %p96 = pneg %p90
      %p97 = scmp.eq.s32.totalorder %s22, 1
      %p98 = por %p96, %p97
      %p99 = scmp.ne.s32.totalorder %s91, %s94
      %p100 = scmp.eq.s32.totalorder %s22, 0
      %p101 = por %p99, %p100
      %p102 = scmp.ne.s32.totalorder %s91, %s94
      %p103 = scmp.eq.s32.totalorder %s27, 1
      %p104 = por %p102, %p103
      %p105 = scmp.ne.s32.totalorder %s94, %s95
      %p106 = scmp.eq.s32.totalorder %s27, 0
      %p107 = por %p105, %p106
      %p108 = scmp.ne.s32.totalorder %s94, %s95
      %p109 = scmp.eq.s32.totalorder %s28, 1
      %p110 = por %p108, %p109
      %p112 = scmp.ne.s32.totalorder %s95, %s111
      %p113 = scmp.eq.s32.totalorder %s28, 0
      %p114 = por %p112, %p113
      %s115 = ssub.s32 %s30, %s37
      %p116 = scmp.eq.s32.totalorder %s115, 0
      %s118 = sadd.s32 %s117, 1
      %s119 = scalar_select %p116, %s117, %s118
      %p122 = pneg %p116
      %p123 = scmp.eq.s32.totalorder %s22, 1
      %p124 = por %p122, %p123
      %p125 = scmp.ne.s32.totalorder %s117, %s120
      %p126 = scmp.eq.s32.totalorder %s22, 0
      %p127 = por %p125, %p126
      %p128 = scmp.ne.s32.totalorder %s117, %s120
      %p129 = scmp.eq.s32.totalorder %s27, 1
      %p130 = por %p128, %p129
      %p131 = scmp.ne.s32.totalorder %s120, %s121
      %p132 = scmp.eq.s32.totalorder %s27, 0
      %p133 = por %p131, %p132
      %p134 = scmp.ne.s32.totalorder %s120, %s121
      %p135 = scmp.eq.s32.totalorder %s28, 1
      %p136 = por %p134, %p135
      %p138 = scmp.ne.s32.totalorder %s121, %s137
      %p139 = scmp.eq.s32.totalorder %s28, 0
      %p140 = por %p138, %p139
      %s141 = ssub.s32 %s30, %s37
      %p142 = scmp.eq.s32.totalorder %s141, 0
      %s144 = sadd.s32 %s143, 1
      %s145 = scalar_select %p142, %s143, %s144
      %p148 = pneg %p142
      %p149 = scmp.eq.s32.totalorder %s22, 1
      %p150 = por %p148, %p149
      %p151 = scmp.ne.s32.totalorder %s143, %s146
      %p152 = scmp.eq.s32.totalorder %s22, 0
      %p153 = por %p151, %p152
      %p154 = scmp.ne.s32.totalorder %s143, %s146
      %p155 = scmp.eq.s32.totalorder %s27, 1
      %p156 = por %p154, %p155
      %p157 = scmp.ne.s32.totalorder %s146, %s147
      %p158 = scmp.eq.s32.totalorder %s27, 0
      %p159 = por %p157, %p158
      %p160 = scmp.ne.s32.totalorder %s146, %s147
      %p161 = scmp.eq.s32.totalorder %s28, 1
      %p162 = por %p160, %p161
      %p164 = scmp.ne.s32.totalorder %s147, %s163
      %p165 = scmp.eq.s32.totalorder %s28, 0
      %p166 = por %p164, %p165
      %s167 = ssub.s32 %s30, %s37
      %p168 = scmp.eq.s32.totalorder %s167, 0
      %s170 = sadd.s32 %s169, 1
      %s171 = scalar_select %p168, %s169, %s170
      %p174 = pneg %p168
      %p175 = scmp.eq.s32.totalorder %s22, 1
      %p176 = por %p174, %p175
      %p177 = scmp.ne.s32.totalorder %s169, %s172
      %p178 = scmp.eq.s32.totalorder %s22, 0
      %p179 = por %p177, %p178
      %p180 = scmp.ne.s32.totalorder %s169, %s172
      %p181 = scmp.eq.s32.totalorder %s27, 1
      %p182 = por %p180, %p181
      %p183 = scmp.ne.s32.totalorder %s172, %s173
      %p184 = scmp.eq.s32.totalorder %s27, 0
      %p185 = por %p183, %p184
      %p186 = scmp.ne.s32.totalorder %s172, %s173
      %p187 = scmp.eq.s32.totalorder %s28, 1
      %p188 = por %p186, %p187
      %p190 = scmp.ne.s32.totalorder %s173, %s189
      %p191 = scmp.eq.s32.totalorder %s28, 0
      %p192 = por %p190, %p191
      %s193 = ssub.s32 %s30, %s37
      %p194 = scmp.eq.s32.totalorder %s193, 0
      %s196 = sadd.s32 %s195, 1
      %s197 = scalar_select %p194, %s195, %s196
      %p200 = pneg %p194
      %p201 = scmp.eq.s32.totalorder %s22, 1
      %p202 = por %p200, %p201
      %p203 = scmp.ne.s32.totalorder %s195, %s198
      %p204 = scmp.eq.s32.totalorder %s22, 0
      %p205 = por %p203, %p204
      %p206 = scmp.ne.s32.totalorder %s195, %s198
      %p207 = scmp.eq.s32.totalorder %s27, 1
      %p208 = por %p206, %p207
      %p209 = scmp.ne.s32.totalorder %s198, %s199
      %p210 = scmp.eq.s32.totalorder %s27, 0
      %p211 = por %p209, %p210
      %p212 = scmp.ne.s32.totalorder %s198, %s199
      %p213 = scmp.eq.s32.totalorder %s28, 1
      %p214 = por %p212, %p213
      %p216 = scmp.ne.s32.totalorder %s199, %s215
      %p217 = scmp.eq.s32.totalorder %s28, 0
      %p218 = por %p216, %p217
      %s219 = ssub.s32 %s30, %s37
      %p220 = scmp.eq.s32.totalorder %s219, 0
      %s222 = sadd.s32 %s221, 1
      %s223 = scalar_select %p220, %s221, %s222
      %p226 = pneg %p220
      %p227 = scmp.eq.s32.totalorder %s22, 1
      %p228 = por %p226, %p227
      %p229 = scmp.ne.s32.totalorder %s221, %s224
      %p230 = scmp.eq.s32.totalorder %s22, 0
      %p231 = por %p229, %p230
      %p232 = scmp.ne.s32.totalorder %s221, %s224
      %p233 = scmp.eq.s32.totalorder %s27, 1
      %p234 = por %p232, %p233
      %p235 = scmp.ne.s32.totalorder %s224, %s225
      %p236 = scmp.eq.s32.totalorder %s27, 0
      %p237 = por %p235, %p236
      %p238 = scmp.ne.s32.totalorder %s224, %s225
      %p239 = scmp.eq.s32.totalorder %s28, 1
      %p240 = por %p238, %p239
      %p242 = scmp.ne.s32.totalorder %s225, %s241
      %p243 = scmp.eq.s32.totalorder %s28, 0
      %p244 = por %p242, %p243
      %s245 = ssub.s32 %s30, %s37
      %p246 = scmp.eq.s32.totalorder %s245, 0
      %s248 = sadd.s32 %s247, 1
      %s249 = scalar_select %p246, %s247, %s248
      %p252 = pneg %p246
      %p253 = scmp.eq.s32.totalorder %s22, 1
      %p254 = por %p252, %p253
      %p255 = scmp.ne.s32.totalorder %s247, %s250
      %p256 = scmp.eq.s32.totalorder %s22, 0
      %p257 = por %p255, %p256
      %p258 = scmp.ne.s32.totalorder %s247, %s250
      %p259 = scmp.eq.s32.totalorder %s27, 1
      %p260 = por %p258, %p259
      %p261 = scmp.ne.s32.totalorder %s250, %s251
      %p262 = scmp.eq.s32.totalorder %s27, 0
      %p263 = por %p261, %p262
      %p264 = scmp.ne.s32.totalorder %s250, %s251
      %p265 = scmp.eq.s32.totalorder %s28, 1
      %p266 = por %p264, %p265
      %p268 = scmp.ne.s32.totalorder %s251, %s267
      %p269 = scmp.eq.s32.totalorder %s28, 0
      %p270 = por %p268, %p269
      %s271 = ssub.s32 %s30, %s37
      %p272 = scmp.eq.s32.totalorder %s271, 0
      %s274 = sadd.s32 %s273, 1
      %s275 = scalar_select %p272, %s273, %s274
      %p278 = pneg %p272
      %p279 = scmp.eq.s32.totalorder %s22, 1
      %p280 = por %p278, %p279
      %p281 = scmp.ne.s32.totalorder %s273, %s276
      %p282 = scmp.eq.s32.totalorder %s22, 0
      %p283 = por %p281, %p282
      %p284 = scmp.ne.s32.totalorder %s273, %s276
      %p285 = scmp.eq.s32.totalorder %s27, 1
      %p286 = por %p284, %p285
      %p287 = scmp.ne.s32.totalorder %s276, %s277
      %p288 = scmp.eq.s32.totalorder %s27, 0
      %p289 = por %p287, %p288
      %p290 = scmp.ne.s32.totalorder %s276, %s277
      %p291 = scmp.eq.s32.totalorder %s28, 1
      %p292 = por %p290, %p291
      %p294 = scmp.ne.s32.totalorder %s277, %s293
      %p295 = scmp.eq.s32.totalorder %s28, 0
      %p296 = por %p294, %p295
      %s297 = ssub.s32 %s30, %s37
      %p298 = scmp.eq.s32.totalorder %s297, 0
      %s300 = sadd.s32 %s299, 1
      %s301 = scalar_select %p298, %s299, %s300
      %p304 = pneg %p298
      %p305 = scmp.eq.s32.totalorder %s22, 1
      %p306 = por %p304, %p305
      %p307 = scmp.ne.s32.totalorder %s299, %s302
      %p308 = scmp.eq.s32.totalorder %s22, 0
      %p309 = por %p307, %p308
      %p310 = scmp.ne.s32.totalorder %s299, %s302
      %p311 = scmp.eq.s32.totalorder %s27, 1
      %p312 = por %p310, %p311
      %p313 = scmp.ne.s32.totalorder %s302, %s303
      %p314 = scmp.eq.s32.totalorder %s27, 0
      %p315 = por %p313, %p314
      %p316 = scmp.ne.s32.totalorder %s302, %s303
      %p317 = scmp.eq.s32.totalorder %s28, 1
      %p318 = por %p316, %p317
      %p320 = scmp.ne.s32.totalorder %s303, %s319
      %p321 = scmp.eq.s32.totalorder %s28, 0
      %p322 = por %p320, %p321
      %s323 = ssub.s32 %s30, %s37
      %p324 = scmp.eq.s32.totalorder %s323, 0
      %s326 = sadd.s32 %s325, 1
      %s327 = scalar_select %p324, %s325, %s326
      %p330 = pneg %p324
      %p331 = scmp.eq.s32.totalorder %s22, 1
      %p332 = por %p330, %p331
      %p333 = scmp.ne.s32.totalorder %s325, %s328
      %p334 = scmp.eq.s32.totalorder %s22, 0
      %p335 = por %p333, %p334
      %p336 = scmp.ne.s32.totalorder %s325, %s328
      %p337 = scmp.eq.s32.totalorder %s27, 1
      %p338 = por %p336, %p337
      %p339 = scmp.ne.s32.totalorder %s328, %s329
      %p340 = scmp.eq.s32.totalorder %s27, 0
      %p341 = por %p339, %p340
      %p342 = scmp.ne.s32.totalorder %s328, %s329
      %p343 = scmp.eq.s32.totalorder %s28, 1
      %p344 = por %p342, %p343
      %p346 = scmp.ne.s32.totalorder %s329, %s345
      %p347 = scmp.eq.s32.totalorder %s28, 0
      %p348 = por %p346, %p347
      %s349 = ssub.s32 %s30, %s37
      %p350 = scmp.eq.s32.totalorder %s349, 0
      %s352 = sadd.s32 %s351, 1
      %s353 = scalar_select %p350, %s351, %s352
      %p356 = pneg %p350
      %p357 = scmp.eq.s32.totalorder %s22, 1
      %p358 = por %p356, %p357
      %p359 = scmp.ne.s32.totalorder %s351, %s354
      %p360 = scmp.eq.s32.totalorder %s22, 0
      %p361 = por %p359, %p360
      %p362 = scmp.ne.s32.totalorder %s351, %s354
      %p363 = scmp.eq.s32.totalorder %s27, 1
      %p364 = por %p362, %p363
      %p365 = scmp.ne.s32.totalorder %s354, %s355
      %p366 = scmp.eq.s32.totalorder %s27, 0
      %p367 = por %p365, %p366
      %p368 = scmp.ne.s32.totalorder %s354, %s355
      %p369 = scmp.eq.s32.totalorder %s28, 1
      %p370 = por %p368, %p369
      %p372 = scmp.ne.s32.totalorder %s355, %s371
      %p373 = scmp.eq.s32.totalorder %s28, 0
      %p374 = por %p372, %p373
      %s376 = sadd.s32 %s375, 1
      %p379 = scmp.eq.s32.totalorder %s22, 1
      %p380 = scmp.ne.s32.totalorder %s375, %s377
      %p381 = scmp.eq.s32.totalorder %s22, 0
      %p382 = por %p380, %p381
      %p383 = scmp.ne.s32.totalorder %s375, %s377
      %p384 = scmp.eq.s32.totalorder %s27, 1
      %p385 = por %p383, %p384
      %p386 = scmp.ne.s32.totalorder %s377, %s378
      %p387 = scmp.eq.s32.totalorder %s27, 0
      %p388 = por %p386, %p387
      %p389 = scmp.ne.s32.totalorder %s377, %s378
      %p390 = scmp.eq.s32.totalorder %s28, 1
      %p391 = por %p389, %p390
      %p393 = scmp.ne.s32.totalorder %s378, %s392
      %p394 = scmp.eq.s32.totalorder %s28, 0
      %p395 = por %p393, %p394
      %s397 = sadd.s32 %s396, 1
      %p400 = scmp.eq.s32.totalorder %s22, 1
      %p401 = scmp.ne.s32.totalorder %s396, %s398
      %p402 = scmp.eq.s32.totalorder %s22, 0
      %p403 = por %p401, %p402
      %p404 = scmp.ne.s32.totalorder %s396, %s398
      %p405 = scmp.eq.s32.totalorder %s27, 1
      %p406 = por %p404, %p405
      %p407 = scmp.ne.s32.totalorder %s398, %s399
      %p408 = scmp.eq.s32.totalorder %s27, 0
      %p409 = por %p407, %p408
      %p410 = scmp.ne.s32.totalorder %s398, %s399
      %p411 = scmp.eq.s32.totalorder %s28, 1
      %p412 = por %p410, %p411
      %p414 = scmp.ne.s32.totalorder %s399, %s413
      %p415 = scmp.eq.s32.totalorder %s28, 0
      %p416 = por %p414, %p415
      %s417 = ssub.s32 %s29, %s41
      %p418 = scmp.eq.s32.totalorder %s417, 0
      %s420 = sadd.s32 %s419, 1
      %s421 = scalar_select %p418, %s419, %s420
      %p424 = pneg %p418
      %p425 = scmp.eq.s32.totalorder %s22, 1
      %p426 = por %p424, %p425
      %p427 = scmp.ne.s32.totalorder %s419, %s422
      %p428 = scmp.eq.s32.totalorder %s22, 0
      %p429 = por %p427, %p428
      %p430 = scmp.ne.s32.totalorder %s419, %s422
      %p431 = scmp.eq.s32.totalorder %s27, 1
      %p432 = por %p430, %p431
      %p433 = scmp.ne.s32.totalorder %s422, %s423
      %p434 = scmp.eq.s32.totalorder %s27, 0
      %p435 = por %p433, %p434
      %p436 = scmp.ne.s32.totalorder %s422, %s423
      %p437 = scmp.eq.s32.totalorder %s28, 1
      %p438 = por %p436, %p437
      %p440 = scmp.ne.s32.totalorder %s423, %s439
      %p441 = scmp.eq.s32.totalorder %s28, 0
      %p442 = por %p440, %p441
      %p443 = scmp.le.s32.totalorder 1, %s22
      %p444 = scmp.lt.s32.totalorder %s22, 3
      %p445 = pnand %p443, %p444
      %p446 = pneg %p445
      // Predicated region
      $region9: #{tpu_custom_call.1} parent=5 // pred_check
        _
      $region10: #{tpu_custom_call.1} parent=5 // pred_check_branch
        %448 = sbr.rel (%p445) target = $region12
      $region11: #{tpu_custom_call.1} parent=5 // pred_region
        %s449 = ssub.s32 %s22, 1
        // Predicated region
        $region13: #{tpu_custom_call.1} parent=11 // pred_check
          %p450 = pneg %p60
        $region14: #{tpu_custom_call.1} parent=11 // pred_check_branch
          %452 = sbr.rel (%p450) target = $region16
        $region15: #{tpu_custom_call.1} parent=11 // pred_region
          %s453 = smul.u32 2, %s31
          %p454 = scmp.lt.s32.totalorder %s453, 1
          %s455 = scalar_select %p454, %s453, 1
          %s456 = smul.addr %s455, 8
          %s457 = scalar_lea.vmem %s0, %s456
          %s458 = smul.u32 2, %s31
        $region16: #{tpu_custom_call.1} parent=11 // pred_fallthru
          _
        // Predicated region
        $region17: #{tpu_custom_call.1} parent=11 // pred_check
          %p459 = pneg %p81
        $region18: #{tpu_custom_call.1} parent=11 // pred_check_branch
          %461 = sbr.rel (%p459) target = $region20
        $region19: #{tpu_custom_call.1} parent=11 // pred_region
          _
        $region20: #{tpu_custom_call.1} parent=11 // pred_fallthru
          _
        // Predicated region
        $region21: #{tpu_custom_call.1} parent=11 // pred_check
          %p462 = pneg %p388
        $region22: #{tpu_custom_call.1} parent=11 // pred_check_branch
          %464 = sbr.rel (%p462) target = $region24
        $region23: #{tpu_custom_call.1} parent=11 // pred_region
          _
        $region24: #{tpu_custom_call.1} parent=11 // pred_fallthru
          _
        // Predicated region
        $region25: #{tpu_custom_call.1} parent=11 // pred_check
          %p465 = pneg %p409
        $region26: #{tpu_custom_call.1} parent=11 // pred_check_branch
          %467 = sbr.rel (%p465) target = $region28
        $region27: #{tpu_custom_call.1} parent=11 // pred_region
          _
        $region28: #{tpu_custom_call.1} parent=11 // pred_fallthru
          _
      $region12: #{tpu_custom_call.1} parent=5 // pred_fallthru
        _
      %p468 = scmp.lt.s32.totalorder %s22, 2
      // Predicated region
      $region29: #{tpu_custom_call.1} parent=5 // pred_check
        %p469 = pneg %p468
      $region30: #{tpu_custom_call.1} parent=5 // pred_check_branch
        %471 = sbr.rel (%p469) target = $region32
      $region31: #{tpu_custom_call.1} parent=5 // pred_region
        // Predicated region
        $region33: #{tpu_custom_call.1} parent=31 // pred_check
          %p472 = pneg %p101
        $region34: #{tpu_custom_call.1} parent=31 // pred_check_branch
          %474 = sbr.rel (%p472) target = $region36
        $region35: #{tpu_custom_call.1} parent=31 // pred_region
          %p475 = scmp.lt.s32.totalorder %s30, 1
          %s476 = scalar_select %p475, %s30, 1
          %s477 = scalar_lea.vmem %s2, %s476
        $region36: #{tpu_custom_call.1} parent=31 // pred_fallthru
          _
        // Predicated region
        $region37: #{tpu_custom_call.1} parent=31 // pred_check
          %p478 = pneg %p127
        $region38: #{tpu_custom_call.1} parent=31 // pred_check_branch
          %480 = sbr.rel (%p478) target = $region40
        $region39: #{tpu_custom_call.1} parent=31 // pred_region
          %p481 = scmp.lt.s32.totalorder %s30, 1
          %s482 = scalar_select %p481, %s30, 1
          %s483 = scalar_lea.vmem %s3, %s482
        $region40: #{tpu_custom_call.1} parent=31 // pred_fallthru
          _
        // Predicated region
        $region41: #{tpu_custom_call.1} parent=31 // pred_check
          %p484 = pneg %p153
        $region42: #{tpu_custom_call.1} parent=31 // pred_check_branch
          %486 = sbr.rel (%p484) target = $region44
        $region43: #{tpu_custom_call.1} parent=31 // pred_region
          %p487 = scmp.lt.s32.totalorder %s30, 1
          %s488 = scalar_select %p487, %s30, 1
          %s489 = smul.addr %s488, 8
          %s490 = smul.addr %s489, 4
          %s491 = scalar_lea.vmem %s4, %s490
        $region44: #{tpu_custom_call.1} parent=31 // pred_fallthru
          _
        // Predicated region
        $region45: #{tpu_custom_call.1} parent=31 // pred_check
          %p492 = pneg %p179
        $region46: #{tpu_custom_call.1} parent=31 // pred_check_branch
          %494 = sbr.rel (%p492) target = $region48
        $region47: #{tpu_custom_call.1} parent=31 // pred_region
          %p495 = scmp.lt.s32.totalorder %s30, 1
          %s496 = scalar_select %p495, %s30, 1
          %s497 = smul.addr %s496, 8
          %s498 = smul.addr %s497, 4
          %s499 = scalar_lea.vmem %s5, %s498
        $region48: #{tpu_custom_call.1} parent=31 // pred_fallthru
          _
        // Predicated region
        $region49: #{tpu_custom_call.1} parent=31 // pred_check
          %p500 = pneg %p205
        $region50: #{tpu_custom_call.1} parent=31 // pred_check_branch
          %502 = sbr.rel (%p500) target = $region52
        $region51: #{tpu_custom_call.1} parent=31 // pred_region
          %p503 = scmp.lt.s32.totalorder %s30, 1
          %s504 = scalar_select %p503, %s30, 1
          %s505 = scalar_lea.vmem %s6, %s504
        $region52: #{tpu_custom_call.1} parent=31 // pred_fallthru
          _
        // Predicated region
        $region53: #{tpu_custom_call.1} parent=31 // pred_check
          %p506 = pneg %p231
        $region54: #{tpu_custom_call.1} parent=31 // pred_check_branch
          %508 = sbr.rel (%p506) target = $region56
        $region55: #{tpu_custom_call.1} parent=31 // pred_region
          %p509 = scmp.lt.s32.totalorder %s30, 1
          %s510 = scalar_select %p509, %s30, 1
          %s511 = scalar_lea.vmem %s7, %s510
        $region56: #{tpu_custom_call.1} parent=31 // pred_fallthru
          _
        // Predicated region
        $region57: #{tpu_custom_call.1} parent=31 // pred_check
          %p512 = pneg %p257
        $region58: #{tpu_custom_call.1} parent=31 // pred_check_branch
          %514 = sbr.rel (%p512) target = $region60
        $region59: #{tpu_custom_call.1} parent=31 // pred_region
          %p515 = scmp.lt.s32.totalorder %s30, 1
          %s516 = scalar_select %p515, %s30, 1
          %s517 = scalar_lea.vmem %s8, %s516
        $region60: #{tpu_custom_call.1} parent=31 // pred_fallthru
          _
        // Predicated region
        $region61: #{tpu_custom_call.1} parent=31 // pred_check
          %p518 = pneg %p283
        $region62: #{tpu_custom_call.1} parent=31 // pred_check_branch
          %520 = sbr.rel (%p518) target = $region64
        $region63: #{tpu_custom_call.1} parent=31 // pred_region
          %p521 = scmp.lt.s32.totalorder %s30, 1
          %s522 = scalar_select %p521, %s30, 1
          %s523 = smul.addr %s522, 4
          %s524 = smul.addr %s523, 4
          %s525 = scalar_lea.vmem %s9, %s524
        $region64: #{tpu_custom_call.1} parent=31 // pred_fallthru
          _
        // Predicated region
        $region65: #{tpu_custom_call.1} parent=31 // pred_check
          %p526 = pneg %p309
        $region66: #{tpu_custom_call.1} parent=31 // pred_check_branch
          %528 = sbr.rel (%p526) target = $region68
        $region67: #{tpu_custom_call.1} parent=31 // pred_region
          %p529 = scmp.lt.s32.totalorder %s30, 1
          %s530 = scalar_select %p529, %s30, 1
          %s531 = scalar_lea.vmem %s10, %s530
        $region68: #{tpu_custom_call.1} parent=31 // pred_fallthru
          _
        // Predicated region
        $region69: #{tpu_custom_call.1} parent=31 // pred_check
          %p532 = pneg %p335
        $region70: #{tpu_custom_call.1} parent=31 // pred_check_branch
          %534 = sbr.rel (%p532) target = $region72
        $region71: #{tpu_custom_call.1} parent=31 // pred_region
          %p535 = scmp.lt.s32.totalorder %s30, 1
          %s536 = scalar_select %p535, %s30, 1
          %s537 = smul.addr %s536, 8
          %s538 = smul.addr %s537, 4
          %s539 = scalar_lea.vmem %s11, %s538
        $region72: #{tpu_custom_call.1} parent=31 // pred_fallthru
          _
        // Predicated region
        $region73: #{tpu_custom_call.1} parent=31 // pred_check
          %p540 = pneg %p361
        $region74: #{tpu_custom_call.1} parent=31 // pred_check_branch
          %542 = sbr.rel (%p540) target = $region76
        $region75: #{tpu_custom_call.1} parent=31 // pred_region
          %p543 = scmp.lt.s32.totalorder %s30, 1
          %s544 = scalar_select %p543, %s30, 1
          %s545 = scalar_lea.vmem %s12, %s544
        $region76: #{tpu_custom_call.1} parent=31 // pred_fallthru
          _
      $region32: #{tpu_custom_call.1} parent=5 // pred_fallthru
        _
      %p546 = scmp.le.s32.totalorder 1, %s22
      %p547 = scmp.lt.s32.totalorder %s22, 3
      %p548 = pnand %p546, %p547
      %p549 = pneg %p548
      // Predicated region
      $region77: #{tpu_custom_call.1} parent=5 // pred_check
        _
      $region78: #{tpu_custom_call.1} parent=5 // pred_check_branch
        %551 = sbr.rel (%p548) target = $region80
      $region79: #{tpu_custom_call.1} parent=5 // pred_region
        %s552 = ssub.s32 %s22, 1
        %s553 = smul.u32 2, %s31
        %p554 = scmp.lt.s32.totalorder %s553, 1
        %s555 = scalar_select %p554, %s553, 1
        %s556 = smul.addr %s555, 8
        %s557 = scalar_lea.vmem %s0, %s556
        %p558 = pneg %p60
        %p559 = pneg %p57
        %p560 = pneg %p81
        %p561 = pneg %p78
        %p562 = scmp.lt.s32.totalorder %s32, 1
        %s563 = scalar_select %p562, %s32, 1
        %s564 = scalar_lea.vmem %s2, %s563
        %p565 = pneg %p107
        %p566 = pneg %p104
        %p567 = scmp.lt.s32.totalorder %s32, 1
        %s568 = scalar_select %p567, %s32, 1
        %s569 = scalar_lea.vmem %s3, %s568
        %p570 = pneg %p133
        %p571 = pneg %p130
        %p572 = scmp.lt.s32.totalorder %s32, 1
        %s573 = scalar_select %p572, %s32, 1
        %s574 = smul.addr %s573, 8
        %s575 = smul.addr %s574, 4
        %s576 = scalar_lea.vmem %s4, %s575
        %p577 = pneg %p159
        %p578 = pneg %p156
        %p579 = scmp.lt.s32.totalorder %s32, 1
        %s580 = scalar_select %p579, %s32, 1
        %s581 = smul.addr %s580, 8
        %s582 = smul.addr %s581, 4
        %s583 = scalar_lea.vmem %s5, %s582
        %p584 = pneg %p185
        %p585 = pneg %p182
        %p586 = scmp.lt.s32.totalorder %s32, 1
        %s587 = scalar_select %p586, %s32, 1
        %s588 = scalar_lea.vmem %s6, %s587
        %p589 = pneg %p211
        %p590 = pneg %p208
        %p591 = scmp.lt.s32.totalorder %s32, 1
        %s592 = scalar_select %p591, %s32, 1
        %s593 = scalar_lea.vmem %s7, %s592
        %p594 = pneg %p237
        %p595 = pneg %p234
        %p596 = scmp.lt.s32.totalorder %s32, 1
        %s597 = scalar_select %p596, %s32, 1
        %s598 = scalar_lea.vmem %s8, %s597
        %p599 = pneg %p263
        %p600 = pneg %p260
        %p601 = scmp.lt.s32.totalorder %s32, 1
        %s602 = scalar_select %p601, %s32, 1
        %s603 = smul.addr %s602, 4
        %s604 = smul.addr %s603, 4
        %s605 = scalar_lea.vmem %s9, %s604
        %p606 = pneg %p289
        %p607 = pneg %p286
        %p608 = scmp.lt.s32.totalorder %s32, 1
        %s609 = scalar_select %p608, %s32, 1
        %s610 = scalar_lea.vmem %s10, %s609
        %p611 = pneg %p315
        %p612 = pneg %p312
        %p613 = scmp.lt.s32.totalorder %s32, 1
        %s614 = scalar_select %p613, %s32, 1
        %s615 = smul.addr %s614, 8
        %s616 = smul.addr %s615, 4
        %s617 = scalar_lea.vmem %s11, %s616
        %p618 = pneg %p341
        %p619 = pneg %p338
        %p620 = scmp.lt.s32.totalorder %s32, 1
        %s621 = scalar_select %p620, %s32, 1
        %s622 = scalar_lea.vmem %s12, %s621
        %p623 = pneg %p367
        %p624 = pneg %p364
        %p625 = pneg %p388
        %p626 = pneg %p385
        %p627 = pneg %p409
        %p628 = pneg %p406
        %p629 = pneg %p435
        %p630 = pneg %p432
        %s631 = smul.u32 2, %s31
        %p632 = scmp.lt.s32.totalorder %s631, 1
        %s633 = scalar_select %p632, %s631, 1
        %s634 = smul.addr %s633, 8
        %s635 = scalar_lea.vmem %s0, %s634
        %s636 = smul.u32 2, %s31
        %p637 = scmp.lt.s32.totalorder %s32, 1
        %s638 = scalar_select %p637, %s32, 1
        %s639 = scalar_lea.vmem %s2, %s638
        %p640 = scmp.lt.s32.totalorder %s32, 1
        %s641 = scalar_select %p640, %s32, 1
        %s642 = scalar_lea.vmem %s3, %s641
        %p643 = scmp.lt.s32.totalorder %s32, 1
        %s644 = scalar_select %p643, %s32, 1
        %s645 = smul.addr %s644, 8
        %s646 = smul.addr %s645, 4
        %s647 = scalar_lea.vmem %s4, %s646
        %p648 = scmp.lt.s32.totalorder %s32, 1
        %s649 = scalar_select %p648, %s32, 1
        %s650 = smul.addr %s649, 8
        %s651 = smul.addr %s650, 4
        %s652 = scalar_lea.vmem %s5, %s651
        %p653 = scmp.lt.s32.totalorder %s32, 1
        %s654 = scalar_select %p653, %s32, 1
        %s655 = scalar_lea.vmem %s6, %s654
        %p656 = scmp.lt.s32.totalorder %s32, 1
        %s657 = scalar_select %p656, %s32, 1
        %s658 = scalar_lea.vmem %s7, %s657
        %p659 = scmp.lt.s32.totalorder %s32, 1
        %s660 = scalar_select %p659, %s32, 1
        %s661 = scalar_lea.vmem %s8, %s660
        %p662 = scmp.lt.s32.totalorder %s32, 1
        %s663 = scalar_select %p662, %s32, 1
        %s664 = smul.addr %s663, 4
        %s665 = smul.addr %s664, 4
        %s666 = scalar_lea.vmem %s9, %s665
        %p667 = scmp.lt.s32.totalorder %s32, 1
        %s668 = scalar_select %p667, %s32, 1
        %s669 = scalar_lea.vmem %s10, %s668
        %p670 = scmp.lt.s32.totalorder %s32, 1
        %s671 = scalar_select %p670, %s32, 1
        %s672 = smul.addr %s671, 8
        %s673 = smul.addr %s672, 4
        %s674 = scalar_lea.vmem %s11, %s673
        %p675 = scmp.lt.s32.totalorder %s32, 1
        %s676 = scalar_select %p675, %s32, 1
        %s677 = scalar_lea.vmem %s12, %s676
        %s678 = smul.u32 2, %s31
        %p680 = scmp.eq.s32.totalorder %s32, 0
        // Predicated region
        $region81: #{tpu_custom_call.1} parent=79 // pred_check
          %p681 = pneg %p680
        $region82: #{tpu_custom_call.1} parent=79 // pred_check_branch
          %683 = sbr.rel (%p681) target = $region84
        $region83: #{tpu_custom_call.1} parent=79 // pred_region
          %v684 = vld [vmem:[%s635] sm:$0xff]
          %v685 = vld [vmem:[%s635 + $0x8] sm:$0xff]
          %v686 = vld [vmem:[%s1] sm:$0xff]
          %v687 = vadd.f32 %v684, %v686
          %v688 = vadd.f32 %v685, %v686
          %vm689 = vcmask 261120
          %690 = vst.msk [vmem:[#allocation2] sm:$0xff] %vm689, %v687
          %691 = vst.msk [vmem:[#allocation2 + $0x8] sm:$0xff] %vm689, %v688
        $region84: #{tpu_custom_call.1} parent=79 // pred_fallthru
          _
        %v692 = vld [vmem:[#allocation2] sm:$0xff]
        %v693 = vld [vmem:[#allocation2 + $0x8] sm:$0xff]
        %v694 = vld [vmem:[%s639] sm:$0x1]
        %v695 = vld [vmem:[%s642] sm:$0x1]
        %vm696 = vcmask 261120
        %v697 = vsel %vm696, %v692, 0.0
        %698 = vadd.xlane.f32.xlu0 %v697
        %v699 = vpop.xlane.xlu0 %698
        %v700 = vsel %vm696, %v693, 0.0
        %701 = vadd.xlane.f32.xlu0 %v700
        %v702 = vpop.xlane.xlu0 %701
        %v703 = vrcp.pop 32.0
        %v704 = vmul.f32 %v699, %v703
        %v705 = vmul.f32 %v702, %v703
        %v706 = vsub.f32 %v692, %v704
        %v707 = vsub.f32 %v693, %v705
        %v708 = vmul.f32 %v706, %v706
        %v709 = vmul.f32 %v707, %v707
        %v710 = vsel %vm696, %v708, 0.0
        %711 = vadd.xlane.f32.xlu0 %v710
        %v712 = vpop.xlane.xlu0 %711
        %v713 = vsel %vm696, %v709, 0.0
        %714 = vadd.xlane.f32.xlu0 %v713
        %v715 = vpop.xlane.xlu0 %714
        %v716 = vmul.f32 %v712, %v703
        %v717 = vmul.f32 %v715, %v703
        %v718 = vadd.f32 %v716, 1e-05
        %v719 = vadd.f32 %v717, 1e-05
        %v720 = vrsqrt.pop %v718
        %v721 = vrsqrt.pop %v719
        %v722 = vmul.f32 %v706, %v720
        %v723 = vmul.f32 %v707, %v721
        %v725 = vlaneseq
        %v726 = vshrl.u32 %v725, 7
        %v727 = vsub.s32 0, %v726
        %v728 = vrot.slane %v694, %v727
        %v730 = vmul.f32 %v722, %v728
        %v731 = vmul.f32 %v723, %v728
        %v733 = vlaneseq
        %v734 = vshrl.u32 %v733, 7
        %v735 = vsub.s32 0, %v734
        %v736 = vrot.slane %v695, %v735
        %v738 = vadd.f32 %v730, %v736
        %v739 = vadd.f32 %v731, %v736
        %v740 = vpack.c.bf16 %v739, %v738
        %v741 = vld [vmem:[%s647] sm:$0xff]
        %v742 = vld [vmem:[%s647 + $0x8] sm:$0xff]
        %v743 = vld [vmem:[%s647 + $0x10] sm:$0xff]
        %v744 = vld [vmem:[%s647 + $0x18] sm:$0xff]
        %v749 = vunpack.c.l.b16 %v741
        %v750 = vunpack.c.h.b16 %v741
        %v751 = vunpack.c.l.b16 %v742
        %v752 = vunpack.c.h.b16 %v742
        %v753 = vunpack.c.l.b16 %v743
        %v754 = vunpack.c.h.b16 %v743
        %v755 = vunpack.c.l.b16 %v744
        %v756 = vunpack.c.h.b16 %v744
        %v757 = vpack.c.b16 %v751, %v749
        %v758 = vpack.c.b16 %v752, %v750
        %v759 = vpack.c.b16 %v755, %v753
        %v760 = vpack.c.b16 %v756, %v754
        %v766 = vsel %vm696, %v740, 0
        %768 = vmatprep.subr.bf16.mxu0 %v758
        %769 = vmatpush1.bf16.msra.mxu0 %v757
        %770 = vmatprep.subr.bf16.mxu0 %v760
        %771 = vmatpush1.bf16.msra.mxu0 %v759
        %772 = vmatprep.subr.bf16.mxu0 0
        %773 = vmatpush1.bf16.msra.mxu0 0
        %774 = vmatprep.subr.bf16.mxu0 0
        %775 = vmatpush1.bf16.msra.mxu0 0
        %776 = vmatprep.subr.bf16.mxu0 0
        %777 = vmatpush1.bf16.msra.mxu0 0
        %778 = vmatprep.subr.bf16.mxu0 0
        %779 = vmatpush1.bf16.msra.mxu0 0
        %780 = vmatprep.subr.bf16.mxu0 0
        %781 = vmatpush1.bf16.msra.mxu0 0
        %782 = vmatprep.subr.bf16.mxu0 0
        %783 = vmatpush1.bf16.msra.mxu0 0
        %784 = vmatprep.subr.bf16.mxu0 0
        %785 = vmatpush1.bf16.msra.mxu0 0
        %786 = vmatprep.subr.bf16.mxu0 0
        %787 = vmatpush1.bf16.msra.mxu0 0
        %788 = vmatprep.subr.bf16.mxu0 0
        %789 = vmatpush1.bf16.msra.mxu0 0
        %790 = vmatprep.subr.bf16.mxu0 0
        %791 = vmatpush1.bf16.msra.mxu0 0
        %792 = vmatprep.subr.bf16.mxu0 0
        %793 = vmatpush1.bf16.msra.mxu0 0
        %794 = vmatprep.subr.bf16.mxu0 0
        %795 = vmatpush1.bf16.msra.mxu0 0
        %796 = vmatprep.subr.bf16.mxu0 0
        %797 = vmatpush1.bf16.msra.mxu0 0
        %798 = vmatprep.subr.bf16.mxu0 0
        %799 = vmatpush1.bf16.msra.mxu0 0
        %800 = vmatprep.mubr.bf16.mxu0 0
        %801 = vmatmul.mubr.bf16.gmra.mrb[0].mxu0 %v766
        %v802 = vpop.f32.mrb[0].mxu0
        %v803 = vadd.f32 0.0, %v802
        %v804 = vpop.f32.mrb[0].mxu0
        %v805 = vadd.f32 0.0, %v804
        %v806 = vpop.f32.mrb[0].mxu0
        %v807 = vadd.f32 0.0, %v806
        %v808 = vpop.f32.mrb[0].mxu0
        %v809 = vadd.f32 0.0, %v808
        %810 = vdwg.mxu0
        %812 = vrot.lane.b32.xlu0 %v803, 112
        %v813 = vpop.permute.xlu0 %812
        %815 = vrot.lane.b32.xlu0 %v803, 96
        %v816 = vpop.permute.xlu0 %815
        %818 = vrot.lane.b32.xlu0 %v803, 80
        %v819 = vpop.permute.xlu0 %818
        %822 = vrot.lane.b32.xlu0 %v807, 112
        %v823 = vpop.permute.xlu0 %822
        %825 = vrot.lane.b32.xlu0 %v807, 96
        %v826 = vpop.permute.xlu0 %825
        %828 = vrot.lane.b32.xlu0 %v807, 80
        %v829 = vpop.permute.xlu0 %828
        %v831 = vpack.c.bf16 %v803, %v803
        %v832 = vpack.c.bf16 %v813, %v813
        %v833 = vpack.c.bf16 %v816, %v816
        %v834 = vpack.c.bf16 %v819, %v819
        %v835 = vpack.c.bf16 %v807, %v807
        %v836 = vpack.c.bf16 %v823, %v823
        %v837 = vpack.c.bf16 %v826, %v826
        %v838 = vpack.c.bf16 %v829, %v829
        %840 = vrot.lane.b32.xlu0 %v805, 112
        %v841 = vpop.permute.xlu0 %840
        %843 = vrot.lane.b32.xlu0 %v805, 96
        %v844 = vpop.permute.xlu0 %843
        %846 = vrot.lane.b32.xlu0 %v805, 80
        %v847 = vpop.permute.xlu0 %846
        %850 = vrot.lane.b32.xlu0 %v809, 112
        %v851 = vpop.permute.xlu0 %850
        %853 = vrot.lane.b32.xlu0 %v809, 96
        %v854 = vpop.permute.xlu0 %853
        %856 = vrot.lane.b32.xlu0 %v809, 80
        %v857 = vpop.permute.xlu0 %856
        %v859 = vpack.c.bf16 %v805, %v805
        %v860 = vpack.c.bf16 %v841, %v841
        %v861 = vpack.c.bf16 %v844, %v844
        %v862 = vpack.c.bf16 %v847, %v847
        %v863 = vpack.c.bf16 %v809, %v809
        %v864 = vpack.c.bf16 %v851, %v851
        %v865 = vpack.c.bf16 %v854, %v854
        %v866 = vpack.c.bf16 %v857, %v857
        %868 = vrot.lane.b32.xlu0 %v831, 64
        %v869 = vpop.permute.xlu0 %868
        %vm870 = vcmask 130048
        %v872 = vsel %vm870, %v831, 0
        %v875 = vsel %vm870, %v869, 0
        %877 = vmatprep.subr.bf16.mxu0 0
        %878 = vmatpush1.bf16.xpose.msra.mxu0 %v875
        %879 = vmatprep.subr.bf16.mxu0 0
        %880 = vmatpush1.bf16.xpose.msra.mxu0 0
        %881 = vmatprep.subr.bf16.mxu0 0
        %882 = vmatpush1.bf16.xpose.msra.mxu0 0
        %883 = vmatprep.subr.bf16.mxu0 0
        %884 = vmatpush1.bf16.xpose.msra.mxu0 0
        %885 = vmatprep.subr.bf16.mxu0 0
        %886 = vmatpush1.bf16.xpose.msra.mxu0 0
        %887 = vmatprep.subr.bf16.mxu0 0
        %888 = vmatpush1.bf16.xpose.msra.mxu0 0
        %889 = vmatprep.subr.bf16.mxu0 0
        %890 = vmatpush1.bf16.xpose.msra.mxu0 0
        %891 = vmatprep.subr.bf16.mxu0 0
        %892 = vmatpush1.bf16.xpose.msra.mxu0 0
        %893 = vmatprep.subr.bf16.mxu0 0
        %894 = vmatpush1.bf16.xpose.msra.mxu0 0
        %895 = vmatprep.subr.bf16.mxu0 0
        %896 = vmatpush1.bf16.xpose.msra.mxu0 0
        %897 = vmatprep.subr.bf16.mxu0 0
        %898 = vmatpush1.bf16.xpose.msra.mxu0 0
        %899 = vmatprep.subr.bf16.mxu0 0
        %900 = vmatpush1.bf16.xpose.msra.mxu0 0
        %901 = vmatprep.subr.bf16.mxu0 0
        %902 = vmatpush1.bf16.xpose.msra.mxu0 0
        %903 = vmatprep.subr.bf16.mxu0 0
        %904 = vmatpush1.bf16.xpose.msra.mxu0 0
        %905 = vmatprep.subr.bf16.mxu0 0
        %906 = vmatpush1.bf16.xpose.msra.mxu0 0
        %907 = vmatprep.subr.bf16.mxu0 0
        %908 = vmatpush1.bf16.xpose.msra.mxu0 0
        %909 = vmatprep.mubr.bf16.mxu0 0
        %910 = vmatmul.mubr.bf16.gmra.mrb[0].mxu0 %v872
        %v911 = vpop.f32.mrb[0].mxu0
        %v912 = vadd.f32 0.0, %v911
        %v913 = vpop.f32.mrb[0].mxu0
        %v914 = vpop.f32.mrb[0].mxu0
        %v915 = vpop.f32.mrb[0].mxu0
        %916 = vdwg.mxu0
        %918 = vrot.lane.b32.xlu0 %v832, 64
        %v919 = vpop.permute.xlu0 %918
        %v921 = vsel %vm870, %v832, 0
        %v924 = vsel %vm870, %v919, 0
        %926 = vmatprep.subr.bf16.mxu0 0
        %927 = vmatpush1.bf16.xpose.msra.mxu0 %v924
        %928 = vmatprep.subr.bf16.mxu0 0
        %929 = vmatpush1.bf16.xpose.msra.mxu0 0
        %930 = vmatprep.subr.bf16.mxu0 0
        %931 = vmatpush1.bf16.xpose.msra.mxu0 0
        %932 = vmatprep.subr.bf16.mxu0 0
        %933 = vmatpush1.bf16.xpose.msra.mxu0 0
        %934 = vmatprep.subr.bf16.mxu0 0
        %935 = vmatpush1.bf16.xpose.msra.mxu0 0
        %936 = vmatprep.subr.bf16.mxu0 0
        %937 = vmatpush1.bf16.xpose.msra.mxu0 0
        %938 = vmatprep.subr.bf16.mxu0 0
        %939 = vmatpush1.bf16.xpose.msra.mxu0 0
        %940 = vmatprep.subr.bf16.mxu0 0
        %941 = vmatpush1.bf16.xpose.msra.mxu0 0
        %942 = vmatprep.subr.bf16.mxu0 0
        %943 = vmatpush1.bf16.xpose.msra.mxu0 0
        %944 = vmatprep.subr.bf16.mxu0 0
        %945 = vmatpush1.bf16.xpose.msra.mxu0 0
        %946 = vmatprep.subr.bf16.mxu0 0
        %947 = vmatpush1.bf16.xpose.msra.mxu0 0
        %948 = vmatprep.subr.bf16.mxu0 0
        %949 = vmatpush1.bf16.xpose.msra.mxu0 0
        %950 = vmatprep.subr.bf16.mxu0 0
        %951 = vmatpush1.bf16.xpose.msra.mxu0 0
        %952 = vmatprep.subr.bf16.mxu0 0
        %953 = vmatpush1.bf16.xpose.msra.mxu0 0
        %954 = vmatprep.subr.bf16.mxu0 0
        %955 = vmatpush1.bf16.xpose.msra.mxu0 0
        %956 = vmatprep.subr.bf16.mxu0 0
        %957 = vmatpush1.bf16.xpose.msra.mxu0 0
        %958 = vmatprep.mubr.bf16.mxu0 0
        %959 = vmatmul.mubr.bf16.gmra.mrb[0].mxu0 %v921
        %v960 = vpop.f32.mrb[0].mxu0
        %v961 = vadd.f32 0.0, %v960
        %v962 = vpop.f32.mrb[0].mxu0
        %v963 = vpop.f32.mrb[0].mxu0
        %v964 = vpop.f32.mrb[0].mxu0
        %965 = vdwg.mxu0
        %967 = vrot.lane.b32.xlu0 %v833, 64
        %v968 = vpop.permute.xlu0 %967
        %v970 = vsel %vm870, %v833, 0
        %v973 = vsel %vm870, %v968, 0
        %975 = vmatprep.subr.bf16.mxu0 0
        %976 = vmatpush1.bf16.xpose.msra.mxu0 %v973
        %977 = vmatprep.subr.bf16.mxu0 0
        %978 = vmatpush1.bf16.xpose.msra.mxu0 0
        %979 = vmatprep.subr.bf16.mxu0 0
        %980 = vmatpush1.bf16.xpose.msra.mxu0 0
        %981 = vmatprep.subr.bf16.mxu0 0
        %982 = vmatpush1.bf16.xpose.msra.mxu0 0
        %983 = vmatprep.subr.bf16.mxu0 0
        %984 = vmatpush1.bf16.xpose.msra.mxu0 0
        %985 = vmatprep.subr.bf16.mxu0 0
        %986 = vmatpush1.bf16.xpose.msra.mxu0 0
        %987 = vmatprep.subr.bf16.mxu0 0
        %988 = vmatpush1.bf16.xpose.msra.mxu0 0
        %989 = vmatprep.subr.bf16.mxu0 0
        %990 = vmatpush1.bf16.xpose.msra.mxu0 0
        %991 = vmatprep.subr.bf16.mxu0 0
        %992 = vmatpush1.bf16.xpose.msra.mxu0 0
        %993 = vmatprep.subr.bf16.mxu0 0
        %994 = vmatpush1.bf16.xpose.msra.mxu0 0
        %995 = vmatprep.subr.bf16.mxu0 0
        %996 = vmatpush1.bf16.xpose.msra.mxu0 0
        %997 = vmatprep.subr.bf16.mxu0 0
        %998 = vmatpush1.bf16.xpose.msra.mxu0 0
        %999 = vmatprep.subr.bf16.mxu0 0
        %1000 = vmatpush1.bf16.xpose.msra.mxu0 0
        %1001 = vmatprep.subr.bf16.mxu0 0
        %1002 = vmatpush1.bf16.xpose.msra.mxu0 0
        %1003 = vmatprep.subr.bf16.mxu0 0
        %1004 = vmatpush1.bf16.xpose.msra.mxu0 0
        %1005 = vmatprep.subr.bf16.mxu0 0
        %1006 = vmatpush1.bf16.xpose.msra.mxu0 0
        %1007 = vmatprep.mubr.bf16.mxu0 0
        %1008 = vmatmul.mubr.bf16.gmra.mrb[0].mxu0 %v970
        %v1009 = vpop.f32.mrb[0].mxu0
        %v1010 = vadd.f32 0.0, %v1009
        %v1011 = vpop.f32.mrb[0].mxu0
        %v1012 = vpop.f32.mrb[0].mxu0
        %v1013 = vpop.f32.mrb[0].mxu0
        %1014 = vdwg.mxu0
        %1016 = vrot.lane.b32.xlu0 %v834, 64
        %v1017 = vpop.permute.xlu0 %1016
        %v1019 = vsel %vm870, %v834, 0
        %v1022 = vsel %vm870, %v1017, 0
        %1024 = vmatprep.subr.bf16.mxu0 0
        %1025 = vmatpush1.bf16.xpose.msra.mxu0 %v1022
        %1026 = vmatprep.subr.bf16.mxu0 0
        %1027 = vmatpush1.bf16.xpose.msra.mxu0 0
        %1028 = vmatprep.subr.bf16.mxu0 0
        %1029 = vmatpush1.bf16.xpose.msra.mxu0 0
        %1030 = vmatprep.subr.bf16.mxu0 0
        %1031 = vmatpush1.bf16.xpose.msra.mxu0 0
        %1032 = vmatprep.subr.bf16.mxu0 0
        %1033 = vmatpush1.bf16.xpose.msra.mxu0 0
        %1034 = vmatprep.subr.bf16.mxu0 0
        %1035 = vmatpush1.bf16.xpose.msra.mxu0 0
        %1036 = vmatprep.subr.bf16.mxu0 0
        %1037 = vmatpush1.bf16.xpose.msra.mxu0 0
        %1038 = vmatprep.subr.bf16.mxu0 0
        %1039 = vmatpush1.bf16.xpose.msra.mxu0 0
        %1040 = vmatprep.subr.bf16.mxu0 0
        %1041 = vmatpush1.bf16.xpose.msra.mxu0 0
        %1042 = vmatprep.subr.bf16.mxu0 0
        %1043 = vmatpush1.bf16.xpose.msra.mxu0 0
        %1044 = vmatprep.subr.bf16.mxu0 0
        %1045 = vmatpush1.bf16.xpose.msra.mxu0 0
        %1046 = vmatprep.subr.bf16.mxu0 0
        %1047 = vmatpush1.bf16.xpose.msra.mxu0 0
        %1048 = vmatprep.subr.bf16.mxu0 0
        %1049 = vmatpush1.bf16.xpose.msra.mxu0 0
        %1050 = vmatprep.subr.bf16.mxu0 0
        %1051 = vmatpush1.bf16.xpose.msra.mxu0 0
        %1052 = vmatprep.subr.bf16.mxu0 0
        %1053 = vmatpush1.bf16.xpose.msra.mxu0 0
        %1054 = vmatprep.subr.bf16.mxu0 0
        %1055 = vmatpush1.bf16.xpose.msra.mxu0 0
        %1056 = vmatprep.mubr.bf16.mxu0 0
        %1057 = vmatmul.mubr.bf16.gmra.mrb[0].mxu0 %v1019
        %v1058 = vpop.f32.mrb[0].mxu0
        %v1059 = vadd.f32 0.0, %v1058
        %v1060 = vpop.f32.mrb[0].mxu0
        %v1061 = vpop.f32.mrb[0].mxu0
        %v1062 = vpop.f32.mrb[0].mxu0
        %1063 = vdwg.mxu0
        %1065 = vrot.lane.b32.xlu0 %v835, 64
        %v1066 = vpop.permute.xlu0 %1065
        %v1068 = vsel %vm870, %v835, 0
        %v1071 = vsel %vm870, %v1066, 0
        %1073 = vmatprep.subr.bf16.mxu0 0
        %1074 = vmatpush1.bf16.xpose.msra.mxu0 %v1071
        %1075 = vmatprep.subr.bf16.mxu0 0
        %1076 = vmatpush1.bf16.xpose.msra.mxu0 0
        %1077 = vmatprep.subr.bf16.mxu0 0
        %1078 = vmatpush1.bf16.xpose.msra.mxu0 0
        %1079 = vmatprep.subr.bf16.mxu0 0
        %1080 = vmatpush1.bf16.xpose.msra.mxu0 0
        %1081 = vmatprep.subr.bf16.mxu0 0
        %1082 = vmatpush1.bf16.xpose.msra.mxu0 0
        %1083 = vmatprep.subr.bf16.mxu0 0
        %1084 = vmatpush1.bf16.xpose.msra.mxu0 0
        %1085 = vmatprep.subr.bf16.mxu0 0
        %1086 = vmatpush1.bf16.xpose.msra.mxu0 0
        %1087 = vmatprep.subr.bf16.mxu0 0
        %1088 = vmatpush1.bf16.xpose.msra.mxu0 0
        %1089 = vmatprep.subr.bf16.mxu0 0
        %1090 = vmatpush1.bf16.xpose.msra.mxu0 0
        %1091 = vmatprep.subr.bf16.mxu0 0
        %1092 = vmatpush1.bf16.xpose.msra.mxu0 0
        %1093 = vmatprep.subr.bf16.mxu0 0
        %1094 = vmatpush1.bf16.xpose.msra.mxu0 0
        %1095 = vmatprep.subr.bf16.mxu0 0
        %1096 = vmatpush1.bf16.xpose.msra.mxu0 0
        %1097 = vmatprep.subr.bf16.mxu0 0
        %1098 = vmatpush1.bf16.xpose.msra.mxu0 0
        %1099 = vmatprep.subr.bf16.mxu0 0
        %1100 = vmatpush1.bf16.xpose.msra.mxu0 0
        %1101 = vmatprep.subr.bf16.mxu0 0
        %1102 = vmatpush1.bf16.xpose.msra.mxu0 0
        %1103 = vmatprep.subr.bf16.mxu0 0
        %1104 = vmatpush1.bf16.xpose.msra.mxu0 0
        %1105 = vmatprep.mubr.bf16.mxu0 0
        %1106 = vmatmul.mubr.bf16.gmra.mrb[0].mxu0 %v1068
        %v1107 = vpop.f32.mrb[0].mxu0
        %v1108 = vadd.f32 0.0, %v1107
        %v1109 = vpop.f32.mrb[0].mxu0
        %v1110 = vpop.f32.mrb[0].mxu0
        %v1111 = vpop.f32.mrb[0].mxu0
        %1112 = vdwg.mxu0
        %1114 = vrot.lane.b32.xlu0 %v836, 64
        %v1115 = vpop.permute.xlu0 %1114
        %v1117 = vsel %vm870, %v836, 0
        %v1120 = vsel %vm870, %v1115, 0
        %1122 = vmatprep.subr.bf16.mxu0 0
        %1123 = vmatpush1.bf16.xpose.msra.mxu0 %v1120
        %1124 = vmatprep.subr.bf16.mxu0 0
        %1125 = vmatpush1.bf16.xpose.msra.mxu0 0
        %1126 = vmatprep.subr.bf16.mxu0 0
        %1127 = vmatpush1.bf16.xpose.msra.mxu0 0
        %1128 = vmatprep.subr.bf16.mxu0 0
        %1129 = vmatpush1.bf16.xpose.msra.mxu0 0
        %1130 = vmatprep.subr.bf16.mxu0 0
        %1131 = vmatpush1.bf16.xpose.msra.mxu0 0
        %1132 = vmatprep.subr.bf16.mxu0 0
        %1133 = vmatpush1.bf16.xpose.msra.mxu0 0
        %1134 = vmatprep.subr.bf16.mxu0 0
        %1135 = vmatpush1.bf16.xpose.msra.mxu0 0
        %1136 = vmatprep.subr.bf16.mxu0 0
        %1137 = vmatpush1.bf16.xpose.msra.mxu0 0
        %1138 = vmatprep.subr.bf16.mxu0 0
        %1139 = vmatpush1.bf16.xpose.msra.mxu0 0
        %1140 = vmatprep.subr.bf16.mxu0 0
        %1141 = vmatpush1.bf16.xpose.msra.mxu0 0
        %1142 = vmatprep.subr.bf16.mxu0 0
        %1143 = vmatpush1.bf16.xpose.msra.mxu0 0
        %1144 = vmatprep.subr.bf16.mxu0 0
        %1145 = vmatpush1.bf16.xpose.msra.mxu0 0
        %1146 = vmatprep.subr.bf16.mxu0 0
        %1147 = vmatpush1.bf16.xpose.msra.mxu0 0
        %1148 = vmatprep.subr.bf16.mxu0 0
        %1149 = vmatpush1.bf16.xpose.msra.mxu0 0
        %1150 = vmatprep.subr.bf16.mxu0 0
        %1151 = vmatpush1.bf16.xpose.msra.mxu0 0
        %1152 = vmatprep.subr.bf16.mxu0 0
        %1153 = vmatpush1.bf16.xpose.msra.mxu0 0
        %1154 = vmatprep.mubr.bf16.mxu0 0
        %1155 = vmatmul.mubr.bf16.gmra.mrb[0].mxu0 %v1117
        %v1156 = vpop.f32.mrb[0].mxu0
        %v1157 = vadd.f32 0.0, %v1156
        %v1158 = vpop.f32.mrb[0].mxu0
        %v1159 = vpop.f32.mrb[0].mxu0
        %v1160 = vpop.f32.mrb[0].mxu0
        %1161 = vdwg.mxu0
        %1163 = vrot.lane.b32.xlu0 %v837, 64
        %v1164 = vpop.permute.xlu0 %1163
        %v1166 = vsel %vm870, %v837, 0
        %v1169 = vsel %vm870, %v1164, 0
        %1171 = vmatprep.subr.bf16.mxu0 0
        %1172 = vmatpush1.bf16.xpose.msra.mxu0 %v1169
        %1173 = vmatprep.subr.bf16.mxu0 0
        %1174 = vmatpush1.bf16.xpose.msra.mxu0 0
        %1175 = vmatprep.subr.bf16.mxu0 0
        %1176 = vmatpush1.bf16.xpose.msra.mxu0 0
        %1177 = vmatprep.subr.bf16.mxu0 0
        %1178 = vmatpush1.bf16.xpose.msra.mxu0 0
        %1179 = vmatprep.subr.bf16.mxu0 0
        %1180 = vmatpush1.bf16.xpose.msra.mxu0 0
        %1181 = vmatprep.subr.bf16.mxu0 0
        %1182 = vmatpush1.bf16.xpose.msra.mxu0 0
        %1183 = vmatprep.subr.bf16.mxu0 0
        %1184 = vmatpush1.bf16.xpose.msra.mxu0 0
        %1185 = vmatprep.subr.bf16.mxu0 0
        %1186 = vmatpush1.bf16.xpose.msra.mxu0 0
        %1187 = vmatprep.subr.bf16.mxu0 0
        %1188 = vmatpush1.bf16.xpose.msra.mxu0 0
        %1189 = vmatprep.subr.bf16.mxu0 0
        %1190 = vmatpush1.bf16.xpose.msra.mxu0 0
        %1191 = vmatprep.subr.bf16.mxu0 0
        %1192 = vmatpush1.bf16.xpose.msra.mxu0 0
        %1193 = vmatprep.subr.bf16.mxu0 0
        %1194 = vmatpush1.bf16.xpose.msra.mxu0 0
        %1195 = vmatprep.subr.bf16.mxu0 0
        %1196 = vmatpush1.bf16.xpose.msra.mxu0 0
        %1197 = vmatprep.subr.bf16.mxu0 0
        %1198 = vmatpush1.bf16.xpose.msra.mxu0 0
        %1199 = vmatprep.subr.bf16.mxu0 0
        %1200 = vmatpush1.bf16.xpose.msra.mxu0 0
        %1201 = vmatprep.subr.bf16.mxu0 0
        %1202 = vmatpush1.bf16.xpose.msra.mxu0 0
        %1203 = vmatprep.mubr.bf16.mxu0 0
        %1204 = vmatmul.mubr.bf16.gmra.mrb[0].mxu0 %v1166
        %v1205 = vpop.f32.mrb[0].mxu0
        %v1206 = vadd.f32 0.0, %v1205
        %v1207 = vpop.f32.mrb[0].mxu0
        %v1208 = vpop.f32.mrb[0].mxu0
        %v1209 = vpop.f32.mrb[0].mxu0
        %1210 = vdwg.mxu0
        %1212 = vrot.lane.b32.xlu0 %v838, 64
        %v1213 = vpop.permute.xlu0 %1212
        %v1215 = vsel %vm870, %v838, 0
        %v1218 = vsel %vm870, %v1213, 0
        %1220 = vmatprep.subr.bf16.mxu0 0
        %1221 = vmatpush1.bf16.xpose.msra.mxu0 %v1218
        %1222 = vmatprep.subr.bf16.mxu0 0
        %1223 = vmatpush1.bf16.xpose.msra.mxu0 0
        %1224 = vmatprep.subr.bf16.mxu0 0
        %1225 = vmatpush1.bf16.xpose.msra.mxu0 0
        %1226 = vmatprep.subr.bf16.mxu0 0
        %1227 = vmatpush1.bf16.xpose.msra.mxu0 0
        %1228 = vmatprep.subr.bf16.mxu0 0
        %1229 = vmatpush1.bf16.xpose.msra.mxu0 0
        %1230 = vmatprep.subr.bf16.mxu0 0
        %1231 = vmatpush1.bf16.xpose.msra.mxu0 0
        %1232 = vmatprep.subr.bf16.mxu0 0
        %1233 = vmatpush1.bf16.xpose.msra.mxu0 0
        %1234 = vmatprep.subr.bf16.mxu0 0
        %1235 = vmatpush1.bf16.xpose.msra.mxu0 0
        %1236 = vmatprep.subr.bf16.mxu0 0
        %1237 = vmatpush1.bf16.xpose.msra.mxu0 0
        %1238 = vmatprep.subr.bf16.mxu0 0
        %1239 = vmatpush1.bf16.xpose.msra.mxu0 0
        %1240 = vmatprep.subr.bf16.mxu0 0
        %1241 = vmatpush1.bf16.xpose.msra.mxu0 0
        %1242 = vmatprep.subr.bf16.mxu0 0
        %1243 = vmatpush1.bf16.xpose.msra.mxu0 0
        %1244 = vmatprep.subr.bf16.mxu0 0
        %1245 = vmatpush1.bf16.xpose.msra.mxu0 0
        %1246 = vmatprep.subr.bf16.mxu0 0
        %1247 = vmatpush1.bf16.xpose.msra.mxu0 0
        %1248 = vmatprep.subr.bf16.mxu0 0
        %1249 = vmatpush1.bf16.xpose.msra.mxu0 0
        %1250 = vmatprep.subr.bf16.mxu0 0
        %1251 = vmatpush1.bf16.xpose.msra.mxu0 0
        %1252 = vmatprep.mubr.bf16.mxu0 0
        %1253 = vmatmul.mubr.bf16.gmra.mrb[0].mxu0 %v1215
        %v1254 = vpop.f32.mrb[0].mxu0
        %v1255 = vadd.f32 0.0, %v1254
        %v1256 = vpop.f32.mrb[0].mxu0
        %v1257 = vpop.f32.mrb[0].mxu0
        %v1258 = vpop.f32.mrb[0].mxu0
        %1259 = vdwg.mxu0
        %vm1260 = vcmask 64512
        %v1261 = vsel %vm1260, %v912, -inf
        %1262 = vmax.xlane.f32.xlu0 %v1261
        %v1263 = vpop.xlane.xlu0 %1262
        %v1264 = vsel %vm1260, %v961, -inf
        %1265 = vmax.xlane.f32.xlu0 %v1264
        %v1266 = vpop.xlane.xlu0 %1265
        %v1267 = vsel %vm1260, %v1010, -inf
        %1268 = vmax.xlane.f32.xlu0 %v1267
        %v1269 = vpop.xlane.xlu0 %1268
        %v1270 = vsel %vm1260, %v1059, -inf
        %1271 = vmax.xlane.f32.xlu0 %v1270
        %v1272 = vpop.xlane.xlu0 %1271
        %v1273 = vsel %vm1260, %v1108, -inf
        %1274 = vmax.xlane.f32.xlu0 %v1273
        %v1275 = vpop.xlane.xlu0 %1274
        %v1276 = vsel %vm1260, %v1157, -inf
        %1277 = vmax.xlane.f32.xlu0 %v1276
        %v1278 = vpop.xlane.xlu0 %1277
        %v1279 = vsel %vm1260, %v1206, -inf
        %1280 = vmax.xlane.f32.xlu0 %v1279
        %v1281 = vpop.xlane.xlu0 %1280
        %v1282 = vsel %vm1260, %v1255, -inf
        %1283 = vmax.xlane.f32.xlu0 %v1282
        %v1284 = vpop.xlane.xlu0 %1283
        %v1285 = vsub.f32 %v912, %v1263
        %v1286 = vsub.f32 %v961, %v1266
        %v1287 = vsub.f32 %v1010, %v1269
        %v1288 = vsub.f32 %v1059, %v1272
        %v1289 = vsub.f32 %v1108, %v1275
        %v1290 = vsub.f32 %v1157, %v1278
        %v1291 = vsub.f32 %v1206, %v1281
        %v1292 = vsub.f32 %v1255, %v1284
        %v1293 = vmul.f32 %v1285, 1.442695
        %v1294 = vpow.pop %v1293
        %v1295 = vmul.f32 %v1286, 1.442695
        %v1296 = vpow.pop %v1295
        %v1297 = vmul.f32 %v1287, 1.442695
        %v1298 = vpow.pop %v1297
        %v1299 = vmul.f32 %v1288, 1.442695
        %v1300 = vpow.pop %v1299
        %v1301 = vmul.f32 %v1289, 1.442695
        %v1302 = vpow.pop %v1301
        %v1303 = vmul.f32 %v1290, 1.442695
        %v1304 = vpow.pop %v1303
        %v1305 = vmul.f32 %v1291, 1.442695
        %v1306 = vpow.pop %v1305
        %v1307 = vmul.f32 %v1292, 1.442695
        %v1308 = vpow.pop %v1307
        %v1309 = vsel %vm1260, %v1294, 0.0
        %1310 = vadd.xlane.f32.xlu0 %v1309
        %v1311 = vpop.xlane.xlu0 %1310
        %v1312 = vsel %vm1260, %v1296, 0.0
        %1313 = vadd.xlane.f32.xlu0 %v1312
        %v1314 = vpop.xlane.xlu0 %1313
        %v1315 = vsel %vm1260, %v1298, 0.0
        %1316 = vadd.xlane.f32.xlu0 %v1315
        %v1317 = vpop.xlane.xlu0 %1316
        %v1318 = vsel %vm1260, %v1300, 0.0
        %1319 = vadd.xlane.f32.xlu0 %v1318
        %v1320 = vpop.xlane.xlu0 %1319
        %v1321 = vsel %vm1260, %v1302, 0.0
        %1322 = vadd.xlane.f32.xlu0 %v1321
        %v1323 = vpop.xlane.xlu0 %1322
        %v1324 = vsel %vm1260, %v1304, 0.0
        %1325 = vadd.xlane.f32.xlu0 %v1324
        %v1326 = vpop.xlane.xlu0 %1325
        %v1327 = vsel %vm1260, %v1306, 0.0
        %1328 = vadd.xlane.f32.xlu0 %v1327
        %v1329 = vpop.xlane.xlu0 %1328
        %v1330 = vsel %vm1260, %v1308, 0.0
        %1331 = vadd.xlane.f32.xlu0 %v1330
        %v1332 = vpop.xlane.xlu0 %1331
        %v1333 = vrcp.pop %v1311
        %v1334 = vrcp.pop %v1314
        %v1335 = vrcp.pop %v1317
        %v1336 = vrcp.pop %v1320
        %v1337 = vrcp.pop %v1323
        %v1338 = vrcp.pop %v1326
        %v1339 = vrcp.pop %v1329
        %v1340 = vrcp.pop %v1332
        %v1341 = vpack.c.bf16 %v1294, %v1294
        %v1342 = vpack.c.bf16 %v1296, %v1296
        %v1343 = vpack.c.bf16 %v1298, %v1298
        %v1344 = vpack.c.bf16 %v1300, %v1300
        %v1345 = vpack.c.bf16 %v1302, %v1302
        %v1346 = vpack.c.bf16 %v1304, %v1304
        %v1347 = vpack.c.bf16 %v1306, %v1306
        %v1348 = vpack.c.bf16 %v1308, %v1308
        %v1350 = vsel %vm1260, %v1341, 0
        %vm1352 = vcmask 1043456
        %v1354 = vsel %vm1352, %v859, 0
        %1356 = vmatprep.subr.bf16.mxu0 0
        %1357 = vmatpush1.bf16.msra.mxu0 %v1354
        %1358 = vmatprep.subr.bf16.mxu0 0
        %1359 = vmatpush1.bf16.msra.mxu0 0
        %1360 = vmatprep.subr.bf16.mxu0 0
        %1361 = vmatpush1.bf16.msra.mxu0 0
        %1362 = vmatprep.subr.bf16.mxu0 0
        %1363 = vmatpush1.bf16.msra.mxu0 0
        %1364 = vmatprep.subr.bf16.mxu0 0
        %1365 = vmatpush1.bf16.msra.mxu0 0
        %1366 = vmatprep.subr.bf16.mxu0 0
        %1367 = vmatpush1.bf16.msra.mxu0 0
        %1368 = vmatprep.subr.bf16.mxu0 0
        %1369 = vmatpush1.bf16.msra.mxu0 0
        %1370 = vmatprep.subr.bf16.mxu0 0
        %1371 = vmatpush1.bf16.msra.mxu0 0
        %1372 = vmatprep.subr.bf16.mxu0 0
        %1373 = vmatpush1.bf16.msra.mxu0 0
        %1374 = vmatprep.subr.bf16.mxu0 0
        %1375 = vmatpush1.bf16.msra.mxu0 0
        %1376 = vmatprep.subr.bf16.mxu0 0
        %1377 = vmatpush1.bf16.msra.mxu0 0
        %1378 = vmatprep.subr.bf16.mxu0 0
        %1379 = vmatpush1.bf16.msra.mxu0 0
        %1380 = vmatprep.subr.bf16.mxu0 0
        %1381 = vmatpush1.bf16.msra.mxu0 0
        %1382 = vmatprep.subr.bf16.mxu0 0
        %1383 = vmatpush1.bf16.msra.mxu0 0
        %1384 = vmatprep.subr.bf16.mxu0 0
        %1385 = vmatpush1.bf16.msra.mxu0 0
        %1386 = vmatprep.subr.bf16.mxu0 0
        %1387 = vmatpush1.bf16.msra.mxu0 0
        %1388 = vmatprep.mubr.bf16.mxu0 0
        %1389 = vmatmul.mubr.bf16.gmra.mrb[0].mxu0 %v1350
        %v1390 = vpop.f32.mrb[0].mxu0
        %v1391 = vadd.f32 0.0, %v1390
        %v1392 = vpop.f32.mrb[0].mxu0
        %v1393 = vpop.f32.mrb[0].mxu0
        %v1394 = vpop.f32.mrb[0].mxu0
        %1395 = vdwg.mxu0
        %v1397 = vsel %vm1260, %v1342, 0
        %v1400 = vsel %vm1352, %v860, 0
        %1402 = vmatprep.subr.bf16.mxu0 0
        %1403 = vmatpush1.bf16.msra.mxu0 %v1400
        %1404 = vmatprep.subr.bf16.mxu0 0
        %1405 = vmatpush1.bf16.msra.mxu0 0
        %1406 = vmatprep.subr.bf16.mxu0 0
        %1407 = vmatpush1.bf16.msra.mxu0 0
        %1408 = vmatprep.subr.bf16.mxu0 0
        %1409 = vmatpush1.bf16.msra.mxu0 0
        %1410 = vmatprep.subr.bf16.mxu0 0
        %1411 = vmatpush1.bf16.msra.mxu0 0
        %1412 = vmatprep.subr.bf16.mxu0 0
        %1413 = vmatpush1.bf16.msra.mxu0 0
        %1414 = vmatprep.subr.bf16.mxu0 0
        %1415 = vmatpush1.bf16.msra.mxu0 0
        %1416 = vmatprep.subr.bf16.mxu0 0
        %1417 = vmatpush1.bf16.msra.mxu0 0
        %1418 = vmatprep.subr.bf16.mxu0 0
        %1419 = vmatpush1.bf16.msra.mxu0 0
        %1420 = vmatprep.subr.bf16.mxu0 0
        %1421 = vmatpush1.bf16.msra.mxu0 0
        %1422 = vmatprep.subr.bf16.mxu0 0
        %1423 = vmatpush1.bf16.msra.mxu0 0
        %1424 = vmatprep.subr.bf16.mxu0 0
        %1425 = vmatpush1.bf16.msra.mxu0 0
        %1426 = vmatprep.subr.bf16.mxu0 0
        %1427 = vmatpush1.bf16.msra.mxu0 0
        %1428 = vmatprep.subr.bf16.mxu0 0
        %1429 = vmatpush1.bf16.msra.mxu0 0
        %1430 = vmatprep.subr.bf16.mxu0 0
        %1431 = vmatpush1.bf16.msra.mxu0 0
        %1432 = vmatprep.subr.bf16.mxu0 0
        %1433 = vmatpush1.bf16.msra.mxu0 0
        %1434 = vmatprep.mubr.bf16.mxu0 0
        %1435 = vmatmul.mubr.bf16.gmra.mrb[0].mxu0 %v1397
        %v1436 = vpop.f32.mrb[0].mxu0
        %v1437 = vadd.f32 0.0, %v1436
        %v1438 = vpop.f32.mrb[0].mxu0
        %v1439 = vpop.f32.mrb[0].mxu0
        %v1440 = vpop.f32.mrb[0].mxu0
        %1441 = vdwg.mxu0
        %v1443 = vsel %vm1260, %v1343, 0
        %v1446 = vsel %vm1352, %v861, 0
        %1448 = vmatprep.subr.bf16.mxu0 0
        %1449 = vmatpush1.bf16.msra.mxu0 %v1446
        %1450 = vmatprep.subr.bf16.mxu0 0
        %1451 = vmatpush1.bf16.msra.mxu0 0
        %1452 = vmatprep.subr.bf16.mxu0 0
        %1453 = vmatpush1.bf16.msra.mxu0 0
        %1454 = vmatprep.subr.bf16.mxu0 0
        %1455 = vmatpush1.bf16.msra.mxu0 0
        %1456 = vmatprep.subr.bf16.mxu0 0
        %1457 = vmatpush1.bf16.msra.mxu0 0
        %1458 = vmatprep.subr.bf16.mxu0 0
        %1459 = vmatpush1.bf16.msra.mxu0 0
        %1460 = vmatprep.subr.bf16.mxu0 0
        %1461 = vmatpush1.bf16.msra.mxu0 0
        %1462 = vmatprep.subr.bf16.mxu0 0
        %1463 = vmatpush1.bf16.msra.mxu0 0
        %1464 = vmatprep.subr.bf16.mxu0 0
        %1465 = vmatpush1.bf16.msra.mxu0 0
        %1466 = vmatprep.subr.bf16.mxu0 0
        %1467 = vmatpush1.bf16.msra.mxu0 0
        %1468 = vmatprep.subr.bf16.mxu0 0
        %1469 = vmatpush1.bf16.msra.mxu0 0
        %1470 = vmatprep.subr.bf16.mxu0 0
        %1471 = vmatpush1.bf16.msra.mxu0 0
        %1472 = vmatprep.subr.bf16.mxu0 0
        %1473 = vmatpush1.bf16.msra.mxu0 0
        %1474 = vmatprep.subr.bf16.mxu0 0
        %1475 = vmatpush1.bf16.msra.mxu0 0
        %1476 = vmatprep.subr.bf16.mxu0 0
        %1477 = vmatpush1.bf16.msra.mxu0 0
        %1478 = vmatprep.subr.bf16.mxu0 0
        %1479 = vmatpush1.bf16.msra.mxu0 0
        %1480 = vmatprep.mubr.bf16.mxu0 0
        %1481 = vmatmul.mubr.bf16.gmra.mrb[0].mxu0 %v1443
        %v1482 = vpop.f32.mrb[0].mxu0
        %v1483 = vadd.f32 0.0, %v1482
        %v1484 = vpop.f32.mrb[0].mxu0
        %v1485 = vpop.f32.mrb[0].mxu0
        %v1486 = vpop.f32.mrb[0].mxu0
        %1487 = vdwg.mxu0
        %v1489 = vsel %vm1260, %v1344, 0
        %v1492 = vsel %vm1352, %v862, 0
        %1494 = vmatprep.subr.bf16.mxu0 0
        %1495 = vmatpush1.bf16.msra.mxu0 %v1492
        %1496 = vmatprep.subr.bf16.mxu0 0
        %1497 = vmatpush1.bf16.msra.mxu0 0
        %1498 = vmatprep.subr.bf16.mxu0 0
        %1499 = vmatpush1.bf16.msra.mxu0 0
        %1500 = vmatprep.subr.bf16.mxu0 0
        %1501 = vmatpush1.bf16.msra.mxu0 0
        %1502 = vmatprep.subr.bf16.mxu0 0
        %1503 = vmatpush1.bf16.msra.mxu0 0
        %1504 = vmatprep.subr.bf16.mxu0 0
        %1505 = vmatpush1.bf16.msra.mxu0 0
        %1506 = vmatprep.subr.bf16.mxu0 0
        %1507 = vmatpush1.bf16.msra.mxu0 0
        %1508 = vmatprep.subr.bf16.mxu0 0
        %1509 = vmatpush1.bf16.msra.mxu0 0
        %1510 = vmatprep.subr.bf16.mxu0 0
        %1511 = vmatpush1.bf16.msra.mxu0 0
        %1512 = vmatprep.subr.bf16.mxu0 0
        %1513 = vmatpush1.bf16.msra.mxu0 0
        %1514 = vmatprep.subr.bf16.mxu0 0
        %1515 = vmatpush1.bf16.msra.mxu0 0
        %1516 = vmatprep.subr.bf16.mxu0 0
        %1517 = vmatpush1.bf16.msra.mxu0 0
        %1518 = vmatprep.subr.bf16.mxu0 0
        %1519 = vmatpush1.bf16.msra.mxu0 0
        %1520 = vmatprep.subr.bf16.mxu0 0
        %1521 = vmatpush1.bf16.msra.mxu0 0
        %1522 = vmatprep.subr.bf16.mxu0 0
        %1523 = vmatpush1.bf16.msra.mxu0 0
        %1524 = vmatprep.subr.bf16.mxu0 0
        %1525 = vmatpush1.bf16.msra.mxu0 0
        %1526 = vmatprep.mubr.bf16.mxu0 0
        %1527 = vmatmul.mubr.bf16.gmra.mrb[0].mxu0 %v1489
        %v1528 = vpop.f32.mrb[0].mxu0
        %v1529 = vadd.f32 0.0, %v1528
        %v1530 = vpop.f32.mrb[0].mxu0
        %v1531 = vpop.f32.mrb[0].mxu0
        %v1532 = vpop.f32.mrb[0].mxu0
        %1533 = vdwg.mxu0
        %v1535 = vsel %vm1260, %v1345, 0
        %v1538 = vsel %vm1352, %v863, 0
        %1540 = vmatprep.subr.bf16.mxu0 0
        %1541 = vmatpush1.bf16.msra.mxu0 %v1538
        %1542 = vmatprep.subr.bf16.mxu0 0
        %1543 = vmatpush1.bf16.msra.mxu0 0
        %1544 = vmatprep.subr.bf16.mxu0 0
        %1545 = vmatpush1.bf16.msra.mxu0 0
        %1546 = vmatprep.subr.bf16.mxu0 0
        %1547 = vmatpush1.bf16.msra.mxu0 0
        %1548 = vmatprep.subr.bf16.mxu0 0
        %1549 = vmatpush1.bf16.msra.mxu0 0
        %1550 = vmatprep.subr.bf16.mxu0 0
        %1551 = vmatpush1.bf16.msra.mxu0 0
        %1552 = vmatprep.subr.bf16.mxu0 0
        %1553 = vmatpush1.bf16.msra.mxu0 0
        %1554 = vmatprep.subr.bf16.mxu0 0
        %1555 = vmatpush1.bf16.msra.mxu0 0
        %1556 = vmatprep.subr.bf16.mxu0 0
        %1557 = vmatpush1.bf16.msra.mxu0 0
        %1558 = vmatprep.subr.bf16.mxu0 0
        %1559 = vmatpush1.bf16.msra.mxu0 0
        %1560 = vmatprep.subr.bf16.mxu0 0
        %1561 = vmatpush1.bf16.msra.mxu0 0
        %1562 = vmatprep.subr.bf16.mxu0 0
        %1563 = vmatpush1.bf16.msra.mxu0 0
        %1564 = vmatprep.subr.bf16.mxu0 0
        %1565 = vmatpush1.bf16.msra.mxu0 0
        %1566 = vmatprep.subr.bf16.mxu0 0
        %1567 = vmatpush1.bf16.msra.mxu0 0
        %1568 = vmatprep.subr.bf16.mxu0 0
        %1569 = vmatpush1.bf16.msra.mxu0 0
        %1570 = vmatprep.subr.bf16.mxu0 0
        %1571 = vmatpush1.bf16.msra.mxu0 0
        %1572 = vmatprep.mubr.bf16.mxu0 0
        %1573 = vmatmul.mubr.bf16.gmra.mrb[0].mxu0 %v1535
        %v1574 = vpop.f32.mrb[0].mxu0
        %v1575 = vadd.f32 0.0, %v1574
        %v1576 = vpop.f32.mrb[0].mxu0
        %v1577 = vpop.f32.mrb[0].mxu0
        %v1578 = vpop.f32.mrb[0].mxu0
        %1579 = vdwg.mxu0
        %v1581 = vsel %vm1260, %v1346, 0
        %v1584 = vsel %vm1352, %v864, 0
        %1586 = vmatprep.subr.bf16.mxu0 0
        %1587 = vmatpush1.bf16.msra.mxu0 %v1584
        %1588 = vmatprep.subr.bf16.mxu0 0
        %1589 = vmatpush1.bf16.msra.mxu0 0
        %1590 = vmatprep.subr.bf16.mxu0 0
        %1591 = vmatpush1.bf16.msra.mxu0 0
        %1592 = vmatprep.subr.bf16.mxu0 0
        %1593 = vmatpush1.bf16.msra.mxu0 0
        %1594 = vmatprep.subr.bf16.mxu0 0
        %1595 = vmatpush1.bf16.msra.mxu0 0
        %1596 = vmatprep.subr.bf16.mxu0 0
        %1597 = vmatpush1.bf16.msra.mxu0 0
        %1598 = vmatprep.subr.bf16.mxu0 0
        %1599 = vmatpush1.bf16.msra.mxu0 0
        %1600 = vmatprep.subr.bf16.mxu0 0
        %1601 = vmatpush1.bf16.msra.mxu0 0
        %1602 = vmatprep.subr.bf16.mxu0 0
        %1603 = vmatpush1.bf16.msra.mxu0 0
        %1604 = vmatprep.subr.bf16.mxu0 0
        %1605 = vmatpush1.bf16.msra.mxu0 0
        %1606 = vmatprep.subr.bf16.mxu0 0
        %1607 = vmatpush1.bf16.msra.mxu0 0
        %1608 = vmatprep.subr.bf16.mxu0 0
        %1609 = vmatpush1.bf16.msra.mxu0 0
        %1610 = vmatprep.subr.bf16.mxu0 0
        %1611 = vmatpush1.bf16.msra.mxu0 0
        %1612 = vmatprep.subr.bf16.mxu0 0
        %1613 = vmatpush1.bf16.msra.mxu0 0
        %1614 = vmatprep.subr.bf16.mxu0 0
        %1615 = vmatpush1.bf16.msra.mxu0 0
        %1616 = vmatprep.subr.bf16.mxu0 0
        %1617 = vmatpush1.bf16.msra.mxu0 0
        %1618 = vmatprep.mubr.bf16.mxu0 0
        %1619 = vmatmul.mubr.bf16.gmra.mrb[0].mxu0 %v1581
        %v1620 = vpop.f32.mrb[0].mxu0
        %v1621 = vadd.f32 0.0, %v1620
        %v1622 = vpop.f32.mrb[0].mxu0
        %v1623 = vpop.f32.mrb[0].mxu0
        %v1624 = vpop.f32.mrb[0].mxu0
        %1625 = vdwg.mxu0
        %v1627 = vsel %vm1260, %v1347, 0
        %v1630 = vsel %vm1352, %v865, 0
        %1632 = vmatprep.subr.bf16.mxu0 0
        %1633 = vmatpush1.bf16.msra.mxu0 %v1630
        %1634 = vmatprep.subr.bf16.mxu0 0
        %1635 = vmatpush1.bf16.msra.mxu0 0
        %1636 = vmatprep.subr.bf16.mxu0 0
        %1637 = vmatpush1.bf16.msra.mxu0 0
        %1638 = vmatprep.subr.bf16.mxu0 0
        %1639 = vmatpush1.bf16.msra.mxu0 0
        %1640 = vmatprep.subr.bf16.mxu0 0
        %1641 = vmatpush1.bf16.msra.mxu0 0
        %1642 = vmatprep.subr.bf16.mxu0 0
        %1643 = vmatpush1.bf16.msra.mxu0 0
        %1644 = vmatprep.subr.bf16.mxu0 0
        %1645 = vmatpush1.bf16.msra.mxu0 0
        %1646 = vmatprep.subr.bf16.mxu0 0
        %1647 = vmatpush1.bf16.msra.mxu0 0
        %1648 = vmatprep.subr.bf16.mxu0 0
        %1649 = vmatpush1.bf16.msra.mxu0 0
        %1650 = vmatprep.subr.bf16.mxu0 0
        %1651 = vmatpush1.bf16.msra.mxu0 0
        %1652 = vmatprep.subr.bf16.mxu0 0
        %1653 = vmatpush1.bf16.msra.mxu0 0
        %1654 = vmatprep.subr.bf16.mxu0 0
        %1655 = vmatpush1.bf16.msra.mxu0 0
        %1656 = vmatprep.subr.bf16.mxu0 0
        %1657 = vmatpush1.bf16.msra.mxu0 0
        %1658 = vmatprep.subr.bf16.mxu0 0
        %1659 = vmatpush1.bf16.msra.mxu0 0
        %1660 = vmatprep.subr.bf16.mxu0 0
        %1661 = vmatpush1.bf16.msra.mxu0 0
        %1662 = vmatprep.subr.bf16.mxu0 0
        %1663 = vmatpush1.bf16.msra.mxu0 0
        %1664 = vmatprep.mubr.bf16.mxu0 0
        %1665 = vmatmul.mubr.bf16.gmra.mrb[0].mxu0 %v1627
        %v1666 = vpop.f32.mrb[0].mxu0
        %v1667 = vadd.f32 0.0, %v1666
        %v1668 = vpop.f32.mrb[0].mxu0
        %v1669 = vpop.f32.mrb[0].mxu0
        %v1670 = vpop.f32.mrb[0].mxu0
        %1671 = vdwg.mxu0
        %v1673 = vsel %vm1260, %v1348, 0
        %v1676 = vsel %vm1352, %v866, 0
        %1678 = vmatprep.subr.bf16.mxu0 0
        %1679 = vmatpush1.bf16.msra.mxu0 %v1676
        %1680 = vmatprep.subr.bf16.mxu0 0
        %1681 = vmatpush1.bf16.msra.mxu0 0
        %1682 = vmatprep.subr.bf16.mxu0 0
        %1683 = vmatpush1.bf16.msra.mxu0 0
        %1684 = vmatprep.subr.bf16.mxu0 0
        %1685 = vmatpush1.bf16.msra.mxu0 0
        %1686 = vmatprep.subr.bf16.mxu0 0
        %1687 = vmatpush1.bf16.msra.mxu0 0
        %1688 = vmatprep.subr.bf16.mxu0 0
        %1689 = vmatpush1.bf16.msra.mxu0 0
        %1690 = vmatprep.subr.bf16.mxu0 0
        %1691 = vmatpush1.bf16.msra.mxu0 0
        %1692 = vmatprep.subr.bf16.mxu0 0
        %1693 = vmatpush1.bf16.msra.mxu0 0
        %1694 = vmatprep.subr.bf16.mxu0 0
        %1695 = vmatpush1.bf16.msra.mxu0 0
        %1696 = vmatprep.subr.bf16.mxu0 0
        %1697 = vmatpush1.bf16.msra.mxu0 0
        %1698 = vmatprep.subr.bf16.mxu0 0
        %1699 = vmatpush1.bf16.msra.mxu0 0
        %1700 = vmatprep.subr.bf16.mxu0 0
        %1701 = vmatpush1.bf16.msra.mxu0 0
        %1702 = vmatprep.subr.bf16.mxu0 0
        %1703 = vmatpush1.bf16.msra.mxu0 0
        %1704 = vmatprep.subr.bf16.mxu0 0
        %1705 = vmatpush1.bf16.msra.mxu0 0
        %1706 = vmatprep.subr.bf16.mxu0 0
        %1707 = vmatpush1.bf16.msra.mxu0 0
        %1708 = vmatprep.subr.bf16.mxu0 0
        %1709 = vmatpush1.bf16.msra.mxu0 0
        %1710 = vmatprep.mubr.bf16.mxu0 0
        %1711 = vmatmul.mubr.bf16.gmra.mrb[0].mxu0 %v1673
        %v1712 = vpop.f32.mrb[0].mxu0
        %v1713 = vadd.f32 0.0, %v1712
        %v1714 = vpop.f32.mrb[0].mxu0
        %v1715 = vpop.f32.mrb[0].mxu0
        %v1716 = vpop.f32.mrb[0].mxu0
        %1717 = vdwg.mxu0
        %v1718 = vmul.f32 %v1391, %v1333
        %v1719 = vmul.f32 %v1437, %v1334
        %v1720 = vmul.f32 %v1483, %v1335
        %v1721 = vmul.f32 %v1529, %v1336
        %v1722 = vmul.f32 %v1575, %v1337
        %v1723 = vmul.f32 %v1621, %v1338
        %v1724 = vmul.f32 %v1667, %v1339
        %v1725 = vmul.f32 %v1713, %v1340
        %1727 = vrot.lane.b32.xlu0 %v1719, 16
        %v1728 = vpop.permute.xlu0 %1727
        %1731 = vrot.lane.b32.xlu0 %v1720, 32
        %v1732 = vpop.permute.xlu0 %1731
        %1735 = vrot.lane.b32.xlu0 %v1721, 48
        %v1736 = vpop.permute.xlu0 %1735
        %v1738 = vsel %vm870, %v1718, %v1728
        %v1739 = vsel %vm696, %v1738, %v1732
        %vm1740 = vcmask 392192
        %v1741 = vsel %vm1740, %v1739, %v1736
        %1743 = vrot.lane.b32.xlu0 %v1723, 16
        %v1744 = vpop.permute.xlu0 %1743
        %1747 = vrot.lane.b32.xlu0 %v1724, 32
        %v1748 = vpop.permute.xlu0 %1747
        %1751 = vrot.lane.b32.xlu0 %v1725, 48
        %v1752 = vpop.permute.xlu0 %1751
        %v1754 = vsel %vm870, %v1722, %v1744
        %v1755 = vsel %vm696, %v1754, %v1748
        %v1756 = vsel %vm1740, %v1755, %v1752
        %v1757 = vpack.c.bf16 %v1756, %v1741
        %v1758 = vld [vmem:[%s652] sm:$0xf]
        %v1759 = vld [vmem:[%s652 + $0x4] sm:$0xf]
        %v1760 = vld [vmem:[%s652 + $0x8] sm:$0xf]
        %v1761 = vld [vmem:[%s652 + $0xc] sm:$0xf]
        %v1762 = vld [vmem:[%s652 + $0x10] sm:$0xf]
        %v1763 = vld [vmem:[%s652 + $0x14] sm:$0xf]
        %v1764 = vld [vmem:[%s652 + $0x18] sm:$0xf]
        %v1765 = vld [vmem:[%s652 + $0x1c] sm:$0xf]
        %v1766 = vld [vmem:[%s655] sm:$0x1]
        %v1768 = vlaneseq
        %v1769 = vshrl.u32 %v1768, 7
        %v1770 = vsub.s32 0, %v1769
        %v1771 = vrot.slane %v1766, %v1770
        %v1781 = vunpack.c.l.b16 %v1758
        %v1782 = vunpack.c.l.b16 %v1759
        %v1783 = vunpack.c.l.b16 %v1760
        %v1784 = vunpack.c.l.b16 %v1761
        %v1785 = vunpack.c.l.b16 %v1762
        %v1786 = vunpack.c.l.b16 %v1763
        %v1787 = vunpack.c.l.b16 %v1764
        %v1788 = vunpack.c.l.b16 %v1765
        %v1789 = vpack.c.b16 %v1782, %v1781
        %v1790 = vpack.c.b16 %v1784, %v1783
        %v1791 = vpack.c.b16 %v1786, %v1785
        %v1792 = vpack.c.b16 %v1788, %v1787
        %vm1797 = vcmask 523264
        %v1799 = vsel %vm1797, %v1757, 0
        %1801 = vmatprep.subr.bf16.mxu0 0
        %1802 = vmatpush1.bf16.msra.mxu0 %v1789
        %1803 = vmatprep.subr.bf16.mxu0 0
        %1804 = vmatpush1.bf16.msra.mxu0 %v1790
        %1805 = vmatprep.subr.bf16.mxu0 0
        %1806 = vmatpush1.bf16.msra.mxu0 %v1791
        %1807 = vmatprep.subr.bf16.mxu0 0
        %1808 = vmatpush1.bf16.msra.mxu0 %v1792
        %1809 = vmatprep.subr.bf16.mxu0 0
        %1810 = vmatpush1.bf16.msra.mxu0 0
        %1811 = vmatprep.subr.bf16.mxu0 0
        %1812 = vmatpush1.bf16.msra.mxu0 0
        %1813 = vmatprep.subr.bf16.mxu0 0
        %1814 = vmatpush1.bf16.msra.mxu0 0
        %1815 = vmatprep.subr.bf16.mxu0 0
        %1816 = vmatpush1.bf16.msra.mxu0 0
        %1817 = vmatprep.subr.bf16.mxu0 0
        %1818 = vmatpush1.bf16.msra.mxu0 0
        %1819 = vmatprep.subr.bf16.mxu0 0
        %1820 = vmatpush1.bf16.msra.mxu0 0
        %1821 = vmatprep.subr.bf16.mxu0 0
        %1822 = vmatpush1.bf16.msra.mxu0 0
        %1823 = vmatprep.subr.bf16.mxu0 0
        %1824 = vmatpush1.bf16.msra.mxu0 0
        %1825 = vmatprep.subr.bf16.mxu0 0
        %1826 = vmatpush1.bf16.msra.mxu0 0
        %1827 = vmatprep.subr.bf16.mxu0 0
        %1828 = vmatpush1.bf16.msra.mxu0 0
        %1829 = vmatprep.subr.bf16.mxu0 0
        %1830 = vmatpush1.bf16.msra.mxu0 0
        %1831 = vmatprep.subr.bf16.mxu0 0
        %1832 = vmatpush1.bf16.msra.mxu0 0
        %1833 = vmatprep.mubr.bf16.mxu0 0
        %1834 = vmatmul.mubr.bf16.gmra.mrb[0].mxu0 %v1799
        %v1835 = vpop.f32.mrb[0].mxu0
        %v1836 = vadd.f32 %v1771, %v1835
        %v1837 = vpop.f32.mrb[0].mxu0
        %v1838 = vpop.f32.mrb[0].mxu0
        %v1839 = vadd.f32 %v1771, %v1838
        %v1840 = vpop.f32.mrb[0].mxu0
        %1841 = vdwg.mxu0
        %v1842 = vadd.f32 %v692, %v1836
        %v1843 = vadd.f32 %v693, %v1839
        %v1844 = vld [vmem:[%s658] sm:$0x1]
        %v1845 = vld [vmem:[%s661] sm:$0x1]
        %v1846 = vsel %vm696, %v1842, 0.0
        %1847 = vadd.xlane.f32.xlu0 %v1846
        %v1848 = vpop.xlane.xlu0 %1847
        %v1849 = vsel %vm696, %v1843, 0.0
        %1850 = vadd.xlane.f32.xlu0 %v1849
        %v1851 = vpop.xlane.xlu0 %1850
        %v1852 = vmul.f32 %v1848, %v703
        %v1853 = vmul.f32 %v1851, %v703
        %v1854 = vsub.f32 %v1842, %v1852
        %v1855 = vsub.f32 %v1843, %v1853
        %v1856 = vmul.f32 %v1854, %v1854
        %v1857 = vmul.f32 %v1855, %v1855
        %v1858 = vsel %vm696, %v1856, 0.0
        %1859 = vadd.xlane.f32.xlu0 %v1858
        %v1860 = vpop.xlane.xlu0 %1859
        %v1861 = vsel %vm696, %v1857, 0.0
        %1862 = vadd.xlane.f32.xlu0 %v1861
        %v1863 = vpop.xlane.xlu0 %1862
        %v1864 = vmul.f32 %v1860, %v703
        %v1865 = vmul.f32 %v1863, %v703
        %v1866 = vadd.f32 %v1864, 1e-05
        %v1867 = vadd.f32 %v1865, 1e-05
        %v1868 = vrsqrt.pop %v1866
        %v1869 = vrsqrt.pop %v1867
        %v1870 = vmul.f32 %v1854, %v1868
        %v1871 = vmul.f32 %v1855, %v1869
        %v1873 = vlaneseq
        %v1874 = vshrl.u32 %v1873, 7
        %v1875 = vsub.s32 0, %v1874
        %v1876 = vrot.slane %v1844, %v1875
        %v1878 = vmul.f32 %v1870, %v1876
        %v1879 = vmul.f32 %v1871, %v1876
        %v1881 = vlaneseq
        %v1882 = vshrl.u32 %v1881, 7
        %v1883 = vsub.s32 0, %v1882
        %v1884 = vrot.slane %v1845, %v1883
        %v1886 = vadd.f32 %v1878, %v1884
        %v1887 = vadd.f32 %v1879, %v1884
        %v1888 = vpack.c.bf16 %v1887, %v1886
        %v1889 = vld [vmem:[%s666] sm:$0xf]
        %v1890 = vld [vmem:[%s666 + $0x4] sm:$0xf]
        %v1891 = vld [vmem:[%s666 + $0x8] sm:$0xf]
        %v1892 = vld [vmem:[%s666 + $0xc] sm:$0xf]
        %v1893 = vld [vmem:[%s669] sm:$0x1]
        %v1895 = vlaneseq
        %v1896 = vshrl.u32 %v1895, 7
        %v1897 = vsub.s32 0, %v1896
        %v1898 = vrot.slane %v1893, %v1897
        %v1904 = vunpack.c.l.b16 %v1889
        %v1905 = vunpack.c.l.b16 %v1890
        %v1906 = vunpack.c.l.b16 %v1891
        %v1907 = vunpack.c.l.b16 %v1892
        %v1908 = vpack.c.b16 %v1905, %v1904
        %v1909 = vpack.c.b16 %v1907, %v1906
        %v1913 = vsel %vm696, %v1888, 0
        %1915 = vmatprep.subr.bf16.mxu0 0
        %1916 = vmatpush1.bf16.msra.mxu0 %v1908
        %1917 = vmatprep.subr.bf16.mxu0 0
        %1918 = vmatpush1.bf16.msra.mxu0 %v1909
        %1919 = vmatprep.subr.bf16.mxu0 0
        %1920 = vmatpush1.bf16.msra.mxu0 0
        %1921 = vmatprep.subr.bf16.mxu0 0
        %1922 = vmatpush1.bf16.msra.mxu0 0
        %1923 = vmatprep.subr.bf16.mxu0 0
        %1924 = vmatpush1.bf16.msra.mxu0 0
        %1925 = vmatprep.subr.bf16.mxu0 0
        %1926 = vmatpush1.bf16.msra.mxu0 0
        %1927 = vmatprep.subr.bf16.mxu0 0
        %1928 = vmatpush1.bf16.msra.mxu0 0
        %1929 = vmatprep.subr.bf16.mxu0 0
        %1930 = vmatpush1.bf16.msra.mxu0 0
        %1931 = vmatprep.subr.bf16.mxu0 0
        %1932 = vmatpush1.bf16.msra.mxu0 0
        %1933 = vmatprep.subr.bf16.mxu0 0
        %1934 = vmatpush1.bf16.msra.mxu0 0
        %1935 = vmatprep.subr.bf16.mxu0 0
        %1936 = vmatpush1.bf16.msra.mxu0 0
        %1937 = vmatprep.subr.bf16.mxu0 0
        %1938 = vmatpush1.bf16.msra.mxu0 0
        %1939 = vmatprep.subr.bf16.mxu0 0
        %1940 = vmatpush1.bf16.msra.mxu0 0
        %1941 = vmatprep.subr.bf16.mxu0 0
        %1942 = vmatpush1.bf16.msra.mxu0 0
        %1943 = vmatprep.subr.bf16.mxu0 0
        %1944 = vmatpush1.bf16.msra.mxu0 0
        %1945 = vmatprep.subr.bf16.mxu0 0
        %1946 = vmatpush1.bf16.msra.mxu0 0
        %1947 = vmatprep.mubr.bf16.mxu0 0
        %1948 = vmatmul.mubr.bf16.gmra.mrb[0].mxu0 %v1913
        %v1949 = vpop.f32.mrb[0].mxu0
        %v1950 = vadd.f32 %v1898, %v1949
        %v1951 = vpop.f32.mrb[0].mxu0
        %v1952 = vpop.f32.mrb[0].mxu0
        %v1953 = vadd.f32 %v1898, %v1952
        %v1954 = vpop.f32.mrb[0].mxu0
        %1955 = vdwg.mxu0
        %v1956 = vmul.f32 %v1950, 0.5
        %v1957 = vmul.f32 %v1953, 0.5
        %v1958 = vmul.f32 %v1950, 0.044715
        %v1959 = vmul.f32 %v1953, 0.044715
        %v1960 = vmul.f32 %v1958, %v1950
        %v1961 = vmul.f32 %v1959, %v1953
        %v1962 = vmul.f32 %v1960, %v1950
        %v1963 = vmul.f32 %v1961, %v1953
        %v1964 = vadd.f32 %v1950, %v1962
        %v1965 = vadd.f32 %v1953, %v1963
        %v1966 = vmul.f32 %v1964, 0.7978846
        %v1967 = vmul.f32 %v1965, 0.7978846
        %v1968 = vtanh.pop %v1966
        %v1969 = vtanh.pop %v1967
        %v1970 = vadd.f32 %v1968, 1.0
        %v1971 = vadd.f32 %v1969, 1.0
        %v1972 = vmul.f32 %v1956, %v1970
        %v1973 = vmul.f32 %v1957, %v1971
        %v1974 = vpack.c.bf16 %v1973, %v1972
        %v1975 = vld [vmem:[%s674] sm:$0xf]
        %v1976 = vld [vmem:[%s674 + $0x4] sm:$0xf]
        %v1977 = vld [vmem:[%s674 + $0x8] sm:$0xf]
        %v1978 = vld [vmem:[%s674 + $0xc] sm:$0xf]
        %v1979 = vld [vmem:[%s674 + $0x10] sm:$0xf]
        %v1980 = vld [vmem:[%s674 + $0x14] sm:$0xf]
        %v1981 = vld [vmem:[%s674 + $0x18] sm:$0xf]
        %v1982 = vld [vmem:[%s674 + $0x1c] sm:$0xf]
        %v1983 = vld [vmem:[%s677] sm:$0x1]
        %v1985 = vlaneseq
        %v1986 = vshrl.u32 %v1985, 7
        %v1987 = vsub.s32 0, %v1986
        %v1988 = vrot.slane %v1983, %v1987
        %v1998 = vunpack.c.l.b16 %v1975
        %v1999 = vunpack.c.l.b16 %v1976
        %v2000 = vunpack.c.l.b16 %v1977
        %v2001 = vunpack.c.l.b16 %v1978
        %v2002 = vunpack.c.l.b16 %v1979
        %v2003 = vunpack.c.l.b16 %v1980
        %v2004 = vunpack.c.l.b16 %v1981
        %v2005 = vunpack.c.l.b16 %v1982
        %v2006 = vpack.c.b16 %v1999, %v1998
        %v2007 = vpack.c.b16 %v2001, %v2000
        %v2008 = vpack.c.b16 %v2003, %v2002
        %v2009 = vpack.c.b16 %v2005, %v2004
        %v2015 = vsel %vm1797, %v1974, 0
        %2017 = vmatprep.subr.bf16.mxu0 0
        %2018 = vmatpush1.bf16.msra.mxu0 %v2006
        %2019 = vmatprep.subr.bf16.mxu0 0
        %2020 = vmatpush1.bf16.msra.mxu0 %v2007
        %2021 = vmatprep.subr.bf16.mxu0 0
        %2022 = vmatpush1.bf16.msra.mxu0 %v2008
        %2023 = vmatprep.subr.bf16.mxu0 0
        %2024 = vmatpush1.bf16.msra.mxu0 %v2009
        %2025 = vmatprep.subr.bf16.mxu0 0
        %2026 = vmatpush1.bf16.msra.mxu0 0
        %2027 = vmatprep.subr.bf16.mxu0 0
        %2028 = vmatpush1.bf16.msra.mxu0 0
        %2029 = vmatprep.subr.bf16.mxu0 0
        %2030 = vmatpush1.bf16.msra.mxu0 0
        %2031 = vmatprep.subr.bf16.mxu0 0
        %2032 = vmatpush1.bf16.msra.mxu0 0
        %2033 = vmatprep.subr.bf16.mxu0 0
        %2034 = vmatpush1.bf16.msra.mxu0 0
        %2035 = vmatprep.subr.bf16.mxu0 0
        %2036 = vmatpush1.bf16.msra.mxu0 0
        %2037 = vmatprep.subr.bf16.mxu0 0
        %2038 = vmatpush1.bf16.msra.mxu0 0
        %2039 = vmatprep.subr.bf16.mxu0 0
        %2040 = vmatpush1.bf16.msra.mxu0 0
        %2041 = vmatprep.subr.bf16.mxu0 0
        %2042 = vmatpush1.bf16.msra.mxu0 0
        %2043 = vmatprep.subr.bf16.mxu0 0
        %2044 = vmatpush1.bf16.msra.mxu0 0
        %2045 = vmatprep.subr.bf16.mxu0 0
        %2046 = vmatpush1.bf16.msra.mxu0 0
        %2047 = vmatprep.subr.bf16.mxu0 0
        %2048 = vmatpush1.bf16.msra.mxu0 0
        %2049 = vmatprep.mubr.bf16.mxu0 0
        %2050 = vmatmul.mubr.bf16.gmra.mrb[0].mxu0 %v2015
        %v2051 = vpop.f32.mrb[0].mxu0
        %v2052 = vadd.f32 %v1988, %v2051
        %v2053 = vpop.f32.mrb[0].mxu0
        %v2054 = vpop.f32.mrb[0].mxu0
        %v2055 = vadd.f32 %v1988, %v2054
        %v2056 = vpop.f32.mrb[0].mxu0
        %2057 = vdwg.mxu0
        %v2058 = vadd.f32 %v1842, %v2052
        %v2059 = vadd.f32 %v1843, %v2055
        %2060 = vst.msk [vmem:[#allocation2] sm:$0xff] %vm696, %v2058
        %2061 = vst.msk [vmem:[#allocation2 + $0x8] sm:$0xff] %vm696, %v2059
        %p2062 = scmp.eq.s32.totalorder %s32, 1
        // Predicated region
        $region85: #{tpu_custom_call.1} parent=79 // pred_check
          %p2063 = pneg %p2062
        $region86: #{tpu_custom_call.1} parent=79 // pred_check_branch
          %2065 = sbr.rel (%p2063) target = $region88
        $region87: #{tpu_custom_call.1} parent=79 // pred_region
          %v2066 = vld [vmem:[%s13] sm:$0x1]
          %v2067 = vld [vmem:[%s14] sm:$0x1]
          %v2068 = vsel %vm696, %v2058, 0.0
          %2069 = vadd.xlane.f32.xlu0 %v2068
          %v2070 = vpop.xlane.xlu0 %2069
          %v2071 = vsel %vm696, %v2059, 0.0
          %2072 = vadd.xlane.f32.xlu0 %v2071
          %v2073 = vpop.xlane.xlu0 %2072
          %v2074 = vmul.f32 %v2070, %v703
          %v2075 = vmul.f32 %v2073, %v703
          %v2076 = vsub.f32 %v2058, %v2074
          %v2077 = vsub.f32 %v2059, %v2075
          %v2078 = vmul.f32 %v2076, %v2076
          %v2079 = vmul.f32 %v2077, %v2077
          %v2080 = vsel %vm696, %v2078, 0.0
          %2081 = vadd.xlane.f32.xlu0 %v2080
          %v2082 = vpop.xlane.xlu0 %2081
          %v2083 = vsel %vm696, %v2079, 0.0
          %2084 = vadd.xlane.f32.xlu0 %v2083
          %v2085 = vpop.xlane.xlu0 %2084
          %v2086 = vmul.f32 %v2082, %v703
          %v2087 = vmul.f32 %v2085, %v703
          %v2088 = vadd.f32 %v2086, 1e-05
          %v2089 = vadd.f32 %v2087, 1e-05
          %v2090 = vrsqrt.pop %v2088
          %v2091 = vrsqrt.pop %v2089
          %v2092 = vmul.f32 %v2076, %v2090
          %v2093 = vmul.f32 %v2077, %v2091
          %v2095 = vlaneseq
          %v2096 = vshrl.u32 %v2095, 7
          %v2097 = vsub.s32 0, %v2096
          %v2098 = vrot.slane %v2066, %v2097
          %v2100 = vmul.f32 %v2092, %v2098
          %v2101 = vmul.f32 %v2093, %v2098
          %v2103 = vlaneseq
          %v2104 = vshrl.u32 %v2103, 7
          %v2105 = vsub.s32 0, %v2104
          %v2106 = vrot.slane %v2067, %v2105
          %v2108 = vadd.f32 %v2100, %v2106
          %v2109 = vadd.f32 %v2101, %v2106
          %2110 = vst.msk [vmem:[#allocation3] sm:$0xff] %vm696, %v2108
          %s2111 = scalar_lea.vmem [#allocation3], 8
          %2112 = vst.msk [vmem:[%s2111] sm:$0xff] %vm696, %v2109
        $region88: #{tpu_custom_call.1} parent=79 // pred_fallthru
          _
        // Predicated region
        $region89: #{tpu_custom_call.1} parent=79 // pred_check
          %p2113 = pneg %p432
        $region90: #{tpu_custom_call.1} parent=79 // pred_check_branch
          %2115 = sbr.rel (%p2113) target = $region92
        $region91: #{tpu_custom_call.1} parent=79 // pred_region
          %s2116 = smul.u32 2, %s31
          %s2118 = ssub.s32 256, 256
          %2119 = vsyncadd [#allocation4], %s2118
          %s2120 = smul.addr %s2116, 128
          %s2121 = scalar_lea.hbm %s15, %s2120
          %s2122 = sshll.u32 [#allocation3], 4
          %s2123 = int_to_ptr.vmem [resolvable:$true] %s2122
          %2128 = dma.vmem_to_hbm [thread:$0]  %s2123, 256, %s2121, [#allocation4], 128, 128, 8
        $region92: #{tpu_custom_call.1} parent=79 // pred_fallthru
          _
        // Predicated region
        $region93: #{tpu_custom_call.1} parent=79 // pred_check
          %p2129 = pneg %p432
        $region94: #{tpu_custom_call.1} parent=79 // pred_check_branch
          %2131 = sbr.rel (%p2129) target = $region96
        $region95: #{tpu_custom_call.1} parent=79 // pred_region
          %2132 = dma.done [#allocation4], 256
        $region96: #{tpu_custom_call.1} parent=79 // pred_fallthru
          _
      $region80: #{tpu_custom_call.1} parent=5 // pred_fallthru
        _
      %p2133 = scmp.le.s32.totalorder 2, %s22
      // Predicated region
      $region97: #{tpu_custom_call.1} parent=5 // pred_check
        %p2134 = pneg %p2133
      $region98: #{tpu_custom_call.1} parent=5 // pred_check_branch
        %2136 = sbr.rel (%p2134) target = $region100
      $region99: #{tpu_custom_call.1} parent=5 // pred_region
        %s2137 = ssub.s32 %s22, 2
      $region100: #{tpu_custom_call.1} parent=5 // pred_fallthru
        _
    $region6: #{tpu_custom_call.1} parent=1 // loop_footer
      %s26 = sadd.s32 1, %s22
    $region7: #{tpu_custom_call.1} parent=1 // loop_footer_branch
      %21 = sbr.rel target = $region3
    $region8: #{tpu_custom_call.1} parent=1 // loop_exit
      _
    %2138 = vsyncpa [#allocation4], 1
    %s2139 = scalar_lea.sflag [#allocation4], 1
    %2140 = vsyncpa %s2139, 1

</llo_original>
